<compile_context>
chip_gen: v6e
topology: v6e:2x2x1
jax: 0.10.0
libtpu: 0.0.40
codegen_flags: <defaults>
</compile_context>

<pallas_src>
import functools

import jax
import jax.numpy as jnp
import numpy as np
from jax import lax
from jax.experimental import pallas as pl
from jax.experimental.pallas import tpu as pltpu


def _vmem_limit_bytes():
    cap = 64 * 1024 * 1024                      # conservative fallback (v7x)
    try:
        cap = pltpu.get_tpu_info().vmem_capacity_bytes
    except Exception:
        pass
    # ~96 MiB on v5e/v6e (128 MiB VMEM), ~48 MiB on v7x (64 MiB VMEM).
    return int(min(100 * 1024 * 1024, cap * 3 // 4))


_VMEM_LIMIT = _vmem_limit_bytes()


def _pick_tile(dim, preferred=(512, 256, 128)):
    """Largest preferred (256-multiple first) tile dividing `dim`, else full dim."""
    # TODO(synk): pad non-128-divisible dims (e.g. TXL-base d_model=410) instead
    # of falling back to a full-dim block.
    for t in preferred:
        if dim % t == 0:
            return t
    return dim


def _pick_q_tile(qlen, klen, n_head):
    """Largest q tile whose f32 score temporaries (~4x (H, tq, klen)) fit ~32 MiB."""
    budget = 32 * 1024 * 1024
    for t in (512, 256, 128, 64, 32, 16, 8):
        if qlen % t == 0 and 4 * 4 * n_head * t * klen <= budget:
            return t
    return qlen


# ---------------------------------------------------------------------------
# tiled x @ W kernel (weights pre-transposed to (K, N); bf16 MXU, f32 acc)
# ---------------------------------------------------------------------------
def _matmul_kernel(x_ref, w_ref, o_ref, acc_ref):
    @pl.when(pl.program_id(2) == 0)
    def _init():
        acc_ref[...] = jnp.zeros(acc_ref.shape, acc_ref.dtype)

    acc_ref[...] += jnp.dot(x_ref[...], w_ref[...],
                            preferred_element_type=jnp.float32)

    @pl.when(pl.program_id(2) == pl.num_programs(2) - 1)
    def _store():
        o_ref[...] = acc_ref[...].astype(o_ref.dtype)


def matmul(x, w_t, out_dtype=jnp.bfloat16):
    """x: (M, K) @ w_t: (K, N) -> (M, N)."""
    M, K = x.shape
    N = w_t.shape[1]
    tm, tn, tk = _pick_tile(M), _pick_tile(N), _pick_tile(K)
    return pl.pallas_call(
        _matmul_kernel,
        out_shape=jax.ShapeDtypeStruct((M, N), out_dtype),
        grid=(M // tm, N // tn, K // tk),
        in_specs=[pl.BlockSpec((tm, tk), lambda i, j, k: (i, k)),
                  pl.BlockSpec((tk, tn), lambda i, j, k: (k, j))],
        out_specs=pl.BlockSpec((tm, tn), lambda i, j, k: (i, j)),
        scratch_shapes=[pltpu.VMEM((tm, tn), jnp.float32)],
        compiler_params=pltpu.CompilerParams(
            dimension_semantics=("parallel", "parallel", "arbitrary"),
            vmem_limit_bytes=_VMEM_LIMIT),
    )(x, w_t)


# ---------------------------------------------------------------------------
# fused relative attention: grid=(bsz, qlen//tq), heads batched in-kernel
# ---------------------------------------------------------------------------
def _rel_attn_kernel(q_ref, k_ref, v_ref, r_ref, rw_ref, rr_ref, o_ref):
    _, tq, _ = q_ref.shape                      # (H, tq, D)
    klen = k_ref.shape[1]
    qi = pl.program_id(1)

    q = q_ref[...]                              # bf16, pre-scaled by 1/sqrt(D)
    k = k_ref[...]
    v = v_ref[...]
    rk = r_ref[...]
    rw = rw_ref[...]                            # (H, 1, D), pre-scaled
    rr = rr_ref[...]

    # Leading-batch-dim (head) MXU contractions, f32 accumulation.
    ac = jnp.einsum('hqd,hkd->hqk', q + rw, k,
                    preferred_element_type=jnp.float32)
    bd = jnp.einsum('hqd,hkd->hqk', q + rr, rk,
                    preferred_element_type=jnp.float32)

    # Relative shift: out[i, j] = bd[i, (j - i_global - 1) mod klen], a per-row
    # circular roll.  Wrapped entries land only on causally-masked positions
    # (klen == qlen, no mems), so post-softmax results match the PyTorch
    # pad/flatten trick.  Barrel shifter hoisted out of any per-head work
    # (shared iota / amount / bit masks, batched over the head axis).
    row = lax.broadcasted_iota(jnp.int32, (tq, 1), 0) + qi * tq   # global row
    amount = (row + 1) % klen                                     # (tq, 1)
    sel = amount[None]                                            # (1, tq, 1)
    shifted = bd
    for bit in range((klen - 1).bit_length()):
        s = 1 << bit
        # TODO(synk): swap jnp.roll for pltpu.roll (XLU rotate path) once its
        # rotation-direction semantics are pinned for this jax version.
        shifted = jnp.where((sel & s) != 0,
                            jnp.roll(shifted, s, axis=2), shifted)

    score = ac + shifted

    # Causal mask generated in-kernel (nothing streamed from HBM).
    col = lax.broadcasted_iota(jnp.int32, (tq, klen), 1)
    score = jnp.where((col > row)[None], jnp.float32(-1e30), score)

    m = jnp.max(score, axis=-1, keepdims=True)
    e = jnp.exp(score - m)
    l = jnp.sum(e, axis=-1, keepdims=True)
    ctx = jnp.einsum('hqk,hkd->hqd', e.astype(v.dtype), v,
                     preferred_element_type=jnp.float32)
    ctx = ctx * pl.reciprocal(l, approx=True)   # fold softmax denom into PV out
    o_ref[...] = ctx.astype(o_ref.dtype)        # one bulk store


def rel_attention(qh, kh, vh, rh, rw, rr, *, tq):
    bsz, n_head, qlen, d_head = qh.shape
    klen = kh.shape[2]
    return pl.pallas_call(
        _rel_attn_kernel,
        out_shape=jax.ShapeDtypeStruct((bsz, n_head, qlen, d_head),
                                       jnp.bfloat16),
        grid=(bsz, qlen // tq),
        in_specs=[
            pl.BlockSpec((None, n_head, tq, d_head), lambda b, i: (b, 0, i, 0)),
            pl.BlockSpec((None, n_head, klen, d_head), lambda b, i: (b, 0, 0, 0)),
            pl.BlockSpec((None, n_head, klen, d_head), lambda b, i: (b, 0, 0, 0)),
            pl.BlockSpec((n_head, klen, d_head), lambda b, i: (0, 0, 0)),
            pl.BlockSpec((n_head, 1, d_head), lambda b, i: (0, 0, 0)),
            pl.BlockSpec((n_head, 1, d_head), lambda b, i: (0, 0, 0)),
        ],
        out_specs=pl.BlockSpec((None, n_head, tq, d_head),
                               lambda b, i: (b, 0, i, 0)),
        compiler_params=pltpu.CompilerParams(
            dimension_semantics=("parallel", "parallel"),
            vmem_limit_bytes=_VMEM_LIMIT),
    )(qh, kh, vh, rh, rw, rr)


# ---------------------------------------------------------------------------
# fused output projection + residual + LayerNorm, tiled over (batch, qlen)
# ---------------------------------------------------------------------------
def _out_ln_kernel(av_ref, w_ref, wo_ref, g_ref, b_ref, o_ref, *, eps):
    n_head = av_ref.shape[0]
    av = av_ref[...]                            # (H, tq, D) bf16
    wo = wo_ref[...]                            # (H, D, d_model) bf16
    acc = jnp.dot(av[0], wo[0], preferred_element_type=jnp.float32)
    for h in range(1, n_head):                  # leading-dim slices: no relayout
        acc = acc + jnp.dot(av[h], wo[h], preferred_element_type=jnp.float32)
    x = w_ref[...] + acc                        # residual, f32
    mu = jnp.mean(x, axis=-1, keepdims=True)
    var = jnp.mean(jnp.square(x - mu), axis=-1, keepdims=True)
    y = (x - mu) * lax.rsqrt(var + eps)
    o_ref[...] = y * g_ref[...] + b_ref[...]


def out_proj_layernorm(ctx, w_bm, wo_h, gamma, beta, *, tq, eps):
    bsz, n_head, qlen, d_head = ctx.shape
    d_model = w_bm.shape[-1]
    return pl.pallas_call(
        functools.partial(_out_ln_kernel, eps=eps),
        out_shape=jax.ShapeDtypeStruct((bsz, qlen, d_model), jnp.float32),
        grid=(bsz, qlen // tq),
        in_specs=[
            pl.BlockSpec((None, n_head, tq, d_head), lambda b, i: (b, 0, i, 0)),
            pl.BlockSpec((None, tq, d_model), lambda b, i: (b, i, 0)),
            pl.BlockSpec((n_head, d_head, d_model), lambda b, i: (0, 0, 0)),
            pl.BlockSpec((1, d_model), lambda b, i: (0, 0)),
            pl.BlockSpec((1, d_model), lambda b, i: (0, 0)),
        ],
        out_specs=pl.BlockSpec((None, tq, d_model), lambda b, i: (b, i, 0)),
        compiler_params=pltpu.CompilerParams(
            dimension_semantics=("parallel", "parallel"),
            vmem_limit_bytes=_VMEM_LIMIT),
    )(ctx, w_bm, wo_h,
      gamma.reshape(1, -1).astype(jnp.float32),
      beta.reshape(1, -1).astype(jnp.float32))


# ---------------------------------------------------------------------------
# full forward (pre_lnorm=False, mems=None, causal mask, eval mode)
# ---------------------------------------------------------------------------
def rel_partial_mha_forward(w, r, params, n_head, d_head, eps=1e-5):
    qlen, bsz, d_model = w.shape
    rlen = r.shape[0]
    if rlen != qlen:
        # TODO(synk): mems concatenation (klen > qlen) is not wired.
        raise NotImplementedError("klen != qlen (mems) path not implemented")
    HD = n_head * d_head
    scale = 1.0 / (d_head ** 0.5)
    bf16 = jnp.bfloat16

    # Static weight prep (host, one-time): (K, N) layouts, bf16, 1/sqrt(d_head)
    # folded into the Q projection and the two relative biases.
    w_qkv = params["w_qkv"]                                   # (3HD, d_model)
    wq_t = (w_qkv[:HD] * scale).T.astype(bf16)                # (d_model, HD)
    wk_t = w_qkv[HD:2 * HD].T.astype(bf16)
    wv_t = w_qkv[2 * HD:].T.astype(bf16)
    wr_t = params["w_r"].T.astype(bf16)                       # (d_model, HD)
    wo_h = jnp.transpose(params["w_o"].reshape(d_model, n_head, d_head),
                         (1, 2, 0)).astype(bf16)              # (H, D, d_model)
    rw = (params["r_w_bias"] * scale).reshape(n_head, 1, d_head).astype(bf16)
    rr = (params["r_r_bias"] * scale).reshape(n_head, 1, d_head).astype(bf16)

    # TODO(synk): pre_lnorm=True, head_mask, output_attentions and arbitrary
    # attn_mask are not wired (causal mask is generated inside the attention
    # kernel; dropout / dropatt are eval-mode identity).
    w_bm = jnp.transpose(w, (1, 0, 2))                        # (bsz, qlen, dm)
    x2d = w_bm.reshape(bsz * qlen, d_model).astype(bf16)

    q2d = matmul(x2d, wq_t)                                   # (bsz*qlen, HD)
    k2d = matmul(x2d, wk_t)
    v2d = matmul(x2d, wv_t)
    r2d = matmul(r.astype(bf16), wr_t)                        # (rlen, HD)

    def to_heads(x):                                          # -> (B, H, S, D)
        return jnp.transpose(x.reshape(bsz, qlen, n_head, d_head), (0, 2, 1, 3))

    qh, kh, vh = to_heads(q2d), to_heads(k2d), to_heads(v2d)
    rh = jnp.transpose(r2d.reshape(rlen, n_head, d_head), (1, 0, 2))

    tq = _pick_q_tile(qlen, rlen, n_head)
    ctx = rel_attention(qh, kh, vh, rh, rw, rr, tq=tq)        # (B, H, qlen, D)

    out_bm = out_proj_layernorm(ctx, w_bm, wo_h, params["ln_g"],
                                params["ln_b"], tq=tq, eps=eps)
    return jnp.transpose(out_bm, (1, 0, 2))                   # (qlen, bsz, dm)


# ---------------------------------------------------------------------------
# pure-JAX reference (mirrors the PyTorch forward exactly, f32)
# ---------------------------------------------------------------------------
def _rel_shift_ref(x):
    I, J, B, N = x.shape
    zp = jnp.zeros((I, 1, B, N), x.dtype)
    xp = jnp.concatenate([zp, x], axis=1)
    xp = xp.reshape(J + 1, I, B, N)
    return xp[1:].reshape(I, J, B, N)


def reference_forward(w, r, params, attn_mask, n_head, d_head, eps=1e-5):
    qlen, bsz, d_model = w.shape
    rlen = r.shape[0]
    scale = 1.0 / (d_head ** 0.5)
    hp = jax.lax.Precision.HIGHEST
    w_heads = jnp.einsum('ibm,om->ibo', w, params["w_qkv"], precision=hp)
    r_head_k = jnp.einsum('jm,om->jo', r, params["w_r"], precision=hp)
    wq, wk, wv = jnp.split(w_heads, 3, axis=-1)
    wq = wq.reshape(qlen, bsz, n_head, d_head)
    wk = wk.reshape(qlen, bsz, n_head, d_head)
    wv = wv.reshape(qlen, bsz, n_head, d_head)
    r_head_k = r_head_k.reshape(rlen, n_head, d_head)
    AC = jnp.einsum('ibnd,jbnd->ijbn', wq + params["r_w_bias"], wk, precision=hp)
    BD = jnp.einsum('ibnd,jnd->ijbn', wq + params["r_r_bias"], r_head_k,
                    precision=hp)
    BD = _rel_shift_ref(BD)
    score = (AC + BD) * scale
    score = jnp.where(attn_mask[:, :, None, None] == 1, -1e30, score)
    prob = jax.nn.softmax(score, axis=1)
    attn_vec = jnp.einsum('ijbn,jbnd->ibnd', prob, wv, precision=hp)
    attn_vec = attn_vec.reshape(qlen, bsz, n_head * d_head)
    attn_out = jnp.einsum('ibh,mh->ibm', attn_vec, params["w_o"], precision=hp)
    x = w + attn_out
    mu = jnp.mean(x, axis=-1, keepdims=True)
    var = jnp.mean(jnp.square(x - mu), axis=-1, keepdims=True)
    return (x - mu) / jnp.sqrt(var + eps) * params["ln_g"] + params["ln_b"]


if __name__ == "__main__":
    n_head, d_head, d_model = 4, 8, 32
    qlen, bsz = 8, 2
    rlen = qlen

    key = jax.random.PRNGKey(0)
    ks = jax.random.split(key, 7)
    params = {
        "w_qkv": 0.02 * jax.random.normal(ks[0], (3 * n_head * d_head, d_model),
                                          jnp.float32),
        "w_r": 0.02 * jax.random.normal(ks[1], (n_head * d_head, d_model),
                                        jnp.float32),
        "w_o": 0.02 * jax.random.normal(ks[2], (d_model, n_head * d_head),
                                        jnp.float32),
        "r_w_bias": 0.02 * jax.random.normal(ks[3], (n_head, d_head),
                                             jnp.float32),
        "r_r_bias": 0.02 * jax.random.normal(ks[4], (n_head, d_head),
                                             jnp.float32),
        "ln_g": jnp.ones((d_model,), jnp.float32),
        "ln_b": jnp.zeros((d_model,), jnp.float32),
    }
    w = jax.random.normal(ks[5], (qlen, bsz, d_model), jnp.float32)
    r = jax.random.normal(ks[6], (rlen, d_model), jnp.float32)

    fwd = jax.jit(rel_partial_mha_forward, static_argnums=(3, 4))
    out = jax.block_until_ready(fwd(w, r, params, n_head, d_head))

    # Standard Transformer-XL causal mask (no memory) for the f32 reference.
    attn_mask = jnp.triu(jnp.ones((qlen, rlen), jnp.int32), k=1)
    ref = reference_forward(w, r, params, attn_mask, n_head, d_head)

    # bf16 MXU operands + approx reciprocal -> compare at bf16-level tolerance.
    np.testing.assert_allclose(np.asarray(out), np.asarray(ref),
                               rtol=1e-2, atol=1e-2)
    print("KERNEL_OK")
</pallas_src>

<mosaic_0001>
module attributes {stable_mosaic.version = 11 : i64} {
  func.func @_matmul_kernel(%arg0: i32, %arg1: i32, %arg2: i32, %arg3: memref<16x32xbf16, #tpu.memory_space<vmem>>, %arg4: memref<32x32xbf16, #tpu.memory_space<vmem>>, %arg5: memref<16x32xbf16, #tpu.memory_space<vmem>>, %arg6: memref<16x32xf32, #tpu.memory_space<vmem>>) attributes {dimension_semantics = [#tpu.dimension_semantics<parallel>, #tpu.dimension_semantics<parallel>, #tpu.dimension_semantics<arbitrary>], iteration_bounds = array<i64: 1, 1, 1>, scalar_prefetch = 0 : i64, scratch_operands = 1 : i64, tpu.core_type = #tpu.core_type<tc>, window_params = [{transform_indices = @transform_0, window_bounds = array<i64: 16, 32>}, {transform_indices = @transform_1, window_bounds = array<i64: 32, 32>}, {transform_indices = @transform_2, window_bounds = array<i64: 16, 32>}]} {
    %c0_i32 = arith.constant 0 : i32
    %0 = arith.cmpi eq, %arg2, %c0_i32 : i32
    %1 = arith.extui %0 : i1 to i32
    %c0_i32_0 = arith.constant 0 : i32
    %2 = arith.cmpi ne, %1, %c0_i32_0 : i32
    scf.if %2 {
      %cst_10 = arith.constant 0.000000e+00 : f32
      %12 = vector.broadcast %cst_10 : f32 to vector<16x32xf32>
      %c0_11 = arith.constant 0 : index
      %c0_12 = arith.constant 0 : index
      %13 = vector.load %arg6[%c0_11, %c0_12] : memref<16x32xf32, #tpu.memory_space<vmem>>, vector<16x32xf32>
      tpu.vector_store %arg6[%c0_11, %c0_12], %12 {strides = array<i32>} : memref<16x32xf32, #tpu.memory_space<vmem>>, vector<16x32xf32>,
    } else {
    }
    %c0 = arith.constant 0 : index
    %c0_1 = arith.constant 0 : index
    %3 = vector.load %arg6[%c0, %c0_1] : memref<16x32xf32, #tpu.memory_space<vmem>>, vector<16x32xf32>
    %c0_2 = arith.constant 0 : index
    %c0_3 = arith.constant 0 : index
    %4 = vector.load %arg3[%c0_2, %c0_3] : memref<16x32xbf16, #tpu.memory_space<vmem>>, vector<16x32xbf16>
    %c0_4 = arith.constant 0 : index
    %c0_5 = arith.constant 0 : index
    %5 = vector.load %arg4[%c0_4, %c0_5] : memref<32x32xbf16, #tpu.memory_space<vmem>>, vector<32x32xbf16>
    %cst = arith.constant dense<0.000000e+00> : vector<16x32xf32>
    %6 = tpu.matmul %4, %5, %cst {dimension_numbers = #tpu.dot_dimension_numbers<[1], [0], [0], [1], [0, 0, 1, 1], [], []>} : vector<16x32xbf16>, vector<32x32xbf16>, vector<16x32xf32> -> vector<16x32xf32>
    %7 = arith.addf %3, %6 : vector<16x32xf32>
    %c0_6 = arith.constant 0 : index
    %c0_7 = arith.constant 0 : index
    %8 = vector.load %arg6[%c0_6, %c0_7] : memref<16x32xf32, #tpu.memory_space<vmem>>, vector<16x32xf32>
    tpu.vector_store %arg6[%c0_6, %c0_7], %7 {strides = array<i32>} : memref<16x32xf32, #tpu.memory_space<vmem>>, vector<16x32xf32>,
    %c0_i32_8 = arith.constant 0 : i32
    %9 = arith.cmpi eq, %arg2, %c0_i32_8 : i32
    %10 = arith.extui %9 : i1 to i32
    %c0_i32_9 = arith.constant 0 : i32
    %11 = arith.cmpi ne, %10, %c0_i32_9 : i32
    scf.if %11 {
      %c0_10 = arith.constant 0 : index
      %c0_11 = arith.constant 0 : index
      %12 = vector.load %arg6[%c0_10, %c0_11] : memref<16x32xf32, #tpu.memory_space<vmem>>, vector<16x32xf32>
      %13 = arith.truncf %12 : vector<16x32xf32> to vector<16x32xbf16>
      %c0_12 = arith.constant 0 : index
      %c0_13 = arith.constant 0 : index
      %14 = vector.load %arg5[%c0_12, %c0_13] : memref<16x32xbf16, #tpu.memory_space<vmem>>, vector<16x32xbf16>
      tpu.vector_store %arg5[%c0_12, %c0_13], %13 {strides = array<i32>} : memref<16x32xbf16, #tpu.memory_space<vmem>>, vector<16x32xbf16>,
    } else {
    }
    return
  }
  func.func @transform_0(%arg0: i32, %arg1: i32, %arg2: i32) -> (i32, i32) {
    %c0_i32 = arith.constant 0 : i32
    return %arg0, %arg2 : i32, i32
  }
  func.func @transform_1(%arg0: i32, %arg1: i32, %arg2: i32) -> (i32, i32) {
    %c0_i32 = arith.constant 0 : i32
    return %arg2, %arg1 : i32, i32
  }
  func.func @transform_2(%arg0: i32, %arg1: i32, %arg2: i32) -> (i32, i32) {
    %c0_i32 = arith.constant 0 : i32
    return %arg0, %arg1 : i32, i32
  }
}

module attributes {stable_mosaic.version = 11 : i64} {
  func.func @_matmul_kernel(%arg0: i32, %arg1: i32, %arg2: i32, %arg3: memref<8x32xbf16, #tpu.memory_space<vmem>>, %arg4: memref<32x32xbf16, #tpu.memory_space<vmem>>, %arg5: memref<8x32xbf16, #tpu.memory_space<vmem>>, %arg6: memref<8x32xf32, #tpu.memory_space<vmem>>) attributes {dimension_semantics = [#tpu.dimension_semantics<parallel>, #tpu.dimension_semantics<parallel>, #tpu.dimension_semantics<arbitrary>], iteration_bounds = array<i64: 1, 1, 1>, scalar_prefetch = 0 : i64, scratch_operands = 1 : i64, tpu.core_type = #tpu.core_type<tc>, window_params = [{transform_indices = @transform_0, window_bounds = array<i64: 8, 32>}, {transform_indices = @transform_1, window_bounds = array<i64: 32, 32>}, {transform_indices = @transform_2, window_bounds = array<i64: 8, 32>}]} {
    %c0_i32 = arith.constant 0 : i32
    %0 = arith.cmpi eq, %arg2, %c0_i32 : i32
    %1 = arith.extui %0 : i1 to i32
    %c0_i32_0 = arith.constant 0 : i32
    %2 = arith.cmpi ne, %1, %c0_i32_0 : i32
    scf.if %2 {
      %cst_10 = arith.constant 0.000000e+00 : f32
      %12 = vector.broadcast %cst_10 : f32 to vector<8x32xf32>
      %c0_11 = arith.constant 0 : index
      %c0_12 = arith.constant 0 : index
      %13 = vector.load %arg6[%c0_11, %c0_12] : memref<8x32xf32, #tpu.memory_space<vmem>>, vector<8x32xf32>
      tpu.vector_store %arg6[%c0_11, %c0_12], %12 {strides = array<i32>} : memref<8x32xf32, #tpu.memory_space<vmem>>, vector<8x32xf32>,
    } else {
    }
    %c0 = arith.constant 0 : index
    %c0_1 = arith.constant 0 : index
    %3 = vector.load %arg6[%c0, %c0_1] : memref<8x32xf32, #tpu.memory_space<vmem>>, vector<8x32xf32>
    %c0_2 = arith.constant 0 : index
    %c0_3 = arith.constant 0 : index
    %4 = vector.load %arg3[%c0_2, %c0_3] : memref<8x32xbf16, #tpu.memory_space<vmem>>, vector<8x32xbf16>
    %c0_4 = arith.constant 0 : index
    %c0_5 = arith.constant 0 : index
    %5 = vector.load %arg4[%c0_4, %c0_5] : memref<32x32xbf16, #tpu.memory_space<vmem>>, vector<32x32xbf16>
    %cst = arith.constant dense<0.000000e+00> : vector<8x32xf32>
    %6 = tpu.matmul %4, %5, %cst {dimension_numbers = #tpu.dot_dimension_numbers<[1], [0], [0], [1], [0, 0, 1, 1], [], []>} : vector<8x32xbf16>, vector<32x32xbf16>, vector<8x32xf32> -> vector<8x32xf32>
    %7 = arith.addf %3, %6 : vector<8x32xf32>
    %c0_6 = arith.constant 0 : index
    %c0_7 = arith.constant 0 : index
    %8 = vector.load %arg6[%c0_6, %c0_7] : memref<8x32xf32, #tpu.memory_space<vmem>>, vector<8x32xf32>
    tpu.vector_store %arg6[%c0_6, %c0_7], %7 {strides = array<i32>} : memref<8x32xf32, #tpu.memory_space<vmem>>, vector<8x32xf32>,
    %c0_i32_8 = arith.constant 0 : i32
    %9 = arith.cmpi eq, %arg2, %c0_i32_8 : i32
    %10 = arith.extui %9 : i1 to i32
    %c0_i32_9 = arith.constant 0 : i32
    %11 = arith.cmpi ne, %10, %c0_i32_9 : i32
    scf.if %11 {
      %c0_10 = arith.constant 0 : index
      %c0_11 = arith.constant 0 : index
      %12 = vector.load %arg6[%c0_10, %c0_11] : memref<8x32xf32, #tpu.memory_space<vmem>>, vector<8x32xf32>
      %13 = arith.truncf %12 : vector<8x32xf32> to vector<8x32xbf16>
      %c0_12 = arith.constant 0 : index
      %c0_13 = arith.constant 0 : index
      %14 = vector.load %arg5[%c0_12, %c0_13] : memref<8x32xbf16, #tpu.memory_space<vmem>>, vector<8x32xbf16>
      tpu.vector_store %arg5[%c0_12, %c0_13], %13 {strides = array<i32>} : memref<8x32xbf16, #tpu.memory_space<vmem>>, vector<8x32xbf16>,
    } else {
    }
    return
  }
  func.func @transform_0(%arg0: i32, %arg1: i32, %arg2: i32) -> (i32, i32) {
    %c0_i32 = arith.constant 0 : i32
    return %arg0, %arg2 : i32, i32
  }
  func.func @transform_1(%arg0: i32, %arg1: i32, %arg2: i32) -> (i32, i32) {
    %c0_i32 = arith.constant 0 : i32
    return %arg2, %arg1 : i32, i32
  }
  func.func @transform_2(%arg0: i32, %arg1: i32, %arg2: i32) -> (i32, i32) {
    %c0_i32 = arith.constant 0 : i32
    return %arg0, %arg1 : i32, i32
  }
}

module attributes {stable_mosaic.version = 11 : i64} {
  func.func @_rel_attn_kernel(%arg0: i32, %arg1: i32, %arg2: memref<1x4x8x8xbf16, #tpu.memory_space<vmem>>, %arg3: memref<1x4x8x8xbf16, #tpu.memory_space<vmem>>, %arg4: memref<1x4x8x8xbf16, #tpu.memory_space<vmem>>, %arg5: memref<4x8x8xbf16, #tpu.memory_space<vmem>>, %arg6: memref<4x1x8xbf16, #tpu.memory_space<vmem>>, %arg7: memref<4x1x8xbf16, #tpu.memory_space<vmem>>, %arg8: memref<1x4x8x8xbf16, #tpu.memory_space<vmem>>) attributes {dimension_semantics = [#tpu.dimension_semantics<parallel>, #tpu.dimension_semantics<parallel>], iteration_bounds = array<i64: 2, 1>, scalar_prefetch = 0 : i64, scratch_operands = 0 : i64, tpu.core_type = #tpu.core_type<tc>, window_params = [{transform_indices = @transform_0, window_bounds = array<i64: 1, 4, 8, 8>}, {transform_indices = @transform_1, window_bounds = array<i64: 1, 4, 8, 8>}, {transform_indices = @transform_2, window_bounds = array<i64: 1, 4, 8, 8>}, {pipeline_mode = #tpu.pipeline_mode<synchronous>, transform_indices = @transform_3, window_bounds = array<i64: 4, 8, 8>}, {pipeline_mode = #tpu.pipeline_mode<synchronous>, transform_indices = @transform_4, window_bounds = array<i64: 4, 1, 8>}, {pipeline_mode = #tpu.pipeline_mode<synchronous>, transform_indices = @transform_5, window_bounds = array<i64: 4, 1, 8>}, {transform_indices = @transform_6, window_bounds = array<i64: 1, 4, 8, 8>}]} {
    %c0 = arith.constant 0 : index
    %c0_0 = arith.constant 0 : index
    %c0_1 = arith.constant 0 : index
    %c0_2 = arith.constant 0 : index
    %0 = vector.load %arg2[%c0, %c0_0, %c0_1, %c0_2] : memref<1x4x8x8xbf16, #tpu.memory_space<vmem>>, vector<1x4x8x8xbf16>
    %1 = vector.shape_cast %0 : vector<1x4x8x8xbf16> to vector<4x8x8xbf16>
    %c0_3 = arith.constant 0 : index
    %c0_4 = arith.constant 0 : index
    %c0_5 = arith.constant 0 : index
    %c0_6 = arith.constant 0 : index
    %2 = vector.load %arg3[%c0_3, %c0_4, %c0_5, %c0_6] : memref<1x4x8x8xbf16, #tpu.memory_space<vmem>>, vector<1x4x8x8xbf16>
    %3 = vector.shape_cast %2 : vector<1x4x8x8xbf16> to vector<4x8x8xbf16>
    %c0_7 = arith.constant 0 : index
    %c0_8 = arith.constant 0 : index
    %c0_9 = arith.constant 0 : index
    %c0_10 = arith.constant 0 : index
    %4 = vector.load %arg4[%c0_7, %c0_8, %c0_9, %c0_10] : memref<1x4x8x8xbf16, #tpu.memory_space<vmem>>, vector<1x4x8x8xbf16>
    %5 = vector.shape_cast %4 : vector<1x4x8x8xbf16> to vector<4x8x8xbf16>
    %c0_11 = arith.constant 0 : index
    %c0_12 = arith.constant 0 : index
    %c0_13 = arith.constant 0 : index
    %6 = vector.load %arg5[%c0_11, %c0_12, %c0_13] : memref<4x8x8xbf16, #tpu.memory_space<vmem>>, vector<4x8x8xbf16>
    %c0_14 = arith.constant 0 : index
    %c0_15 = arith.constant 0 : index
    %c0_16 = arith.constant 0 : index
    %7 = vector.load %arg6[%c0_14, %c0_15, %c0_16] : memref<4x1x8xbf16, #tpu.memory_space<vmem>>, vector<4x1x8xbf16>
    %c0_17 = arith.constant 0 : index
    %c0_18 = arith.constant 0 : index
    %c0_19 = arith.constant 0 : index
    %8 = vector.load %arg7[%c0_17, %c0_18, %c0_19] : memref<4x1x8xbf16, #tpu.memory_space<vmem>>, vector<4x1x8xbf16>
    %9 = vector.broadcast %7 : vector<4x1x8xbf16> to vector<4x8x8xbf16>
    %10 = arith.addf %1, %9 : vector<4x8x8xbf16>
    "tpu.trace_start"() <{level = 10 : i32, message = "hqd,hkd->hqk"}> : () -> ()
    %cst = arith.constant dense<0.000000e+00> : vector<4x8x8xf32>
    %11 = tpu.matmul %10, %3, %cst {dimension_numbers = #tpu.dot_dimension_numbers<[2], [2], [1], [1], [0, 0, 0, 1, 1, 1], [0], [0]>} : vector<4x8x8xbf16>, vector<4x8x8xbf16>, vector<4x8x8xf32> -> vector<4x8x8xf32>
    "tpu.trace_stop"() : () -> ()
    %12 = vector.broadcast %8 : vector<4x1x8xbf16> to vector<4x8x8xbf16>
    %13 = arith.addf %1, %12 : vector<4x8x8xbf16>
    "tpu.trace_start"() <{level = 10 : i32, message = "hqd,hkd->hqk"}> : () -> ()
    %cst_20 = arith.constant dense<0.000000e+00> : vector<4x8x8xf32>
    %14 = tpu.matmul %13, %6, %cst_20 {dimension_numbers = #tpu.dot_dimension_numbers<[2], [2], [1], [1], [0, 0, 0, 1, 1, 1], [0], [0]>} : vector<4x8x8xbf16>, vector<4x8x8xbf16>, vector<4x8x8xf32> -> vector<4x8x8xf32>
    "tpu.trace_stop"() : () -> ()
    %15 = tpu.iota {dimensions = array<i32: 0>} : vector<8x1xi32>
    %c8_i32 = arith.constant 8 : i32
    %16 = arith.muli %arg1, %c8_i32 : i32
    %17 = vector.broadcast %16 : i32 to vector<8x1xi32>
    %18 = arith.addi %15, %17 : vector<8x1xi32>
    %c1_i32 = arith.constant 1 : i32
    %19 = vector.broadcast %c1_i32 : i32 to vector<8x1xi32>
    %20 = arith.addi %18, %19 : vector<8x1xi32>
    %c8_i32_21 = arith.constant 8 : i32
    %c0_i32 = arith.constant 0 : i32
    %21 = arith.cmpi eq, %c8_i32_21, %c0_i32 : i32
    %c1_i32_22 = arith.constant 1 : i32
    %22 = arith.select %21, %c1_i32_22, %c8_i32_21 : i32
    %23 = vector.broadcast %22 : i32 to vector<8x1xi32>
    %24 = arith.remsi %20, %23 : vector<8x1xi32>
    %c0_i32_23 = arith.constant 0 : i32
    %25 = vector.broadcast %c0_i32_23 : i32 to vector<8x1xi32>
    %26 = arith.cmpi ne, %24, %25 : vector<8x1xi32>
    %c0_i32_24 = arith.constant 0 : i32
    %27 = vector.broadcast %c0_i32_24 : i32 to vector<8x1xi32>
    %28 = arith.cmpi slt, %24, %27 : vector<8x1xi32>
    %c0_i32_25 = arith.constant 0 : i32
    %29 = arith.cmpi slt, %22, %c0_i32_25 : i32
    %30 = vector.broadcast %29 : i1 to vector<8x1xi1>
    %31 = vector.broadcast %30 : vector<8x1xi1> to vector<8x1xi1>
    %32 = arith.xori %28, %31 : vector<8x1xi1>
    %33 = arith.andi %32, %26 : vector<8x1xi1>
    %34 = vector.broadcast %22 : i32 to vector<8x1xi32>
    %35 = arith.addi %24, %34 : vector<8x1xi32>
    %36 = arith.select %33, %35, %24 : vector<8x1xi1>, vector<8x1xi32>
    %37 = vector.shape_cast %36 : vector<8x1xi32> to vector<1x8x1xi32>
    %c1_i32_26 = arith.constant 1 : i32
    %38 = vector.broadcast %c1_i32_26 : i32 to vector<1x8x1xi32>
    %39 = arith.andi %37, %38 : vector<1x8x1xi32>
    %c0_i32_27 = arith.constant 0 : i32
    %40 = vector.broadcast %c0_i32_27 : i32 to vector<1x8x1xi32>
    %41 = arith.cmpi ne, %39, %40 : vector<1x8x1xi32>
    %42 = vector.extract_strided_slice %14 {offsets = [0, 0, 7], sizes = [4, 8, 1], strides = [1, 1, 1]} : vector<4x8x8xf32> to vector<4x8x1xf32>
    %43 = vector.extract_strided_slice %14 {offsets = [0, 0, 0], sizes = [4, 8, 7], strides = [1, 1, 1]} : vector<4x8x8xf32> to vector<4x8x7xf32>
    %44 = tpu.concatenate %42, %43 in 2 : vector<4x8x1xf32>, vector<4x8x7xf32> -> vector<4x8x8xf32>
    %45 = vector.shape_cast %41 : vector<1x8x1xi1> to vector<1x8x1xi1>
    %46 = vector.broadcast %45 : vector<1x8x1xi1> to vector<4x8x8xi1>
    %47 = arith.select %46, %44, %14 : vector<4x8x8xi1>, vector<4x8x8xf32>
    %c2_i32 = arith.constant 2 : i32
    %48 = vector.broadcast %c2_i32 : i32 to vector<1x8x1xi32>
    %49 = arith.andi %37, %48 : vector<1x8x1xi32>
    %c0_i32_28 = arith.constant 0 : i32
    %50 = vector.broadcast %c0_i32_28 : i32 to vector<1x8x1xi32>
    %51 = arith.cmpi ne, %49, %50 : vector<1x8x1xi32>
    %52 = vector.extract_strided_slice %47 {offsets = [0, 0, 6], sizes = [4, 8, 2], strides = [1, 1, 1]} : vector<4x8x8xf32> to vector<4x8x2xf32>
    %53 = vector.extract_strided_slice %47 {offsets = [0, 0, 0], sizes = [4, 8, 6], strides = [1, 1, 1]} : vector<4x8x8xf32> to vector<4x8x6xf32>
    %54 = tpu.concatenate %52, %53 in 2 : vector<4x8x2xf32>, vector<4x8x6xf32> -> vector<4x8x8xf32>
    %55 = vector.shape_cast %51 : vector<1x8x1xi1> to vector<1x8x1xi1>
    %56 = vector.broadcast %55 : vector<1x8x1xi1> to vector<4x8x8xi1>
    %57 = arith.select %56, %54, %47 : vector<4x8x8xi1>, vector<4x8x8xf32>
    %c4_i32 = arith.constant 4 : i32
    %58 = vector.broadcast %c4_i32 : i32 to vector<1x8x1xi32>
    %59 = arith.andi %37, %58 : vector<1x8x1xi32>
    %c0_i32_29 = arith.constant 0 : i32
    %60 = vector.broadcast %c0_i32_29 : i32 to vector<1x8x1xi32>
    %61 = arith.cmpi ne, %59, %60 : vector<1x8x1xi32>
    %62 = vector.extract_strided_slice %57 {offsets = [0, 0, 4], sizes = [4, 8, 4], strides = [1, 1, 1]} : vector<4x8x8xf32> to vector<4x8x4xf32>
    %63 = vector.extract_strided_slice %57 {offsets = [0, 0, 0], sizes = [4, 8, 4], strides = [1, 1, 1]} : vector<4x8x8xf32> to vector<4x8x4xf32>
    %64 = tpu.concatenate %62, %63 in 2 : vector<4x8x4xf32>, vector<4x8x4xf32> -> vector<4x8x8xf32>
    %65 = vector.shape_cast %61 : vector<1x8x1xi1> to vector<1x8x1xi1>
    %66 = vector.broadcast %65 : vector<1x8x1xi1> to vector<4x8x8xi1>
    %67 = arith.select %66, %64, %57 : vector<4x8x8xi1>, vector<4x8x8xf32>
    %68 = arith.addf %11, %67 : vector<4x8x8xf32>
    %69 = tpu.iota {dimensions = array<i32: 1>} : vector<8x8xi32>
    %70 = vector.broadcast %18 : vector<8x1xi32> to vector<8x8xi32>
    %71 = arith.cmpi sgt, %69, %70 : vector<8x8xi32>
    %72 = vector.shape_cast %71 : vector<8x8xi1> to vector<1x8x8xi1>
    %cst_30 = arith.constant -1.000000e+30 : f32
    %73 = vector.shape_cast %72 : vector<1x8x8xi1> to vector<1x8x8xi1>
    %74 = vector.broadcast %73 : vector<1x8x8xi1> to vector<4x8x8xi1>
    %75 = vector.broadcast %cst_30 : f32 to vector<4x8x8xf32>
    %76 = arith.select %74, %75, %68 : vector<4x8x8xi1>, vector<4x8x8xf32>
    %cst_31 = arith.constant dense<0xFF800000> : vector<4x8xf32>
    %77 = vector.multi_reduction <maximumf>, %76, %cst_31 [2] : vector<4x8x8xf32> to vector<4x8xf32>
    %78 = vector.shape_cast %77 : vector<4x8xf32> to vector<4x8x1xf32>
    %79 = vector.broadcast %78 : vector<4x8x1xf32> to vector<4x8x8xf32>
    %80 = arith.subf %76, %79 : vector<4x8x8xf32>
    %81 = math.exp %80 : vector<4x8x8xf32>
    %cst_32 = arith.constant dense<0.000000e+00> : vector<4x8xf32>
    %82 = vector.multi_reduction <add>, %81, %cst_32 [2] : vector<4x8x8xf32> to vector<4x8xf32>
    %83 = vector.shape_cast %82 : vector<4x8xf32> to vector<4x8x1xf32>
    %84 = arith.truncf %81 : vector<4x8x8xf32> to vector<4x8x8xbf16>
    "tpu.trace_start"() <{level = 10 : i32, message = "hqk,hkd->hqd"}> : () -> ()
    %cst_33 = arith.constant dense<0.000000e+00> : vector<4x8x8xf32>
    %85 = tpu.matmul %84, %5, %cst_33 {dimension_numbers = #tpu.dot_dimension_numbers<[2], [1], [1], [2], [0, 0, 0, 1, 1, 2], [0], [0]>} : vector<4x8x8xbf16>, vector<4x8x8xbf16>, vector<4x8x8xf32> -> vector<4x8x8xf32>
    "tpu.trace_stop"() : () -> ()
    %86 = tpu.reciprocal %83 {approx = true} : vector<4x8x1xf32> -> vector<4x8x1xf32>
    %87 = vector.broadcast %86 : vector<4x8x1xf32> to vector<4x8x8xf32>
    %88 = arith.mulf %85, %87 : vector<4x8x8xf32>
    %89 = arith.truncf %88 : vector<4x8x8xf32> to vector<4x8x8xbf16>
    %c0_34 = arith.constant 0 : index
    %c0_35 = arith.constant 0 : index
    %c0_36 = arith.constant 0 : index
    %c0_37 = arith.constant 0 : index
    %90 = vector.load %arg8[%c0_34, %c0_35, %c0_36, %c0_37] : memref<1x4x8x8xbf16, #tpu.memory_space<vmem>>, vector<1x4x8x8xbf16>
    %91 = vector.shape_cast %90 : vector<1x4x8x8xbf16> to vector<4x8x8xbf16>
    %92 = vector.shape_cast %89 : vector<4x8x8xbf16> to vector<1x4x8x8xbf16>
    tpu.vector_store %arg8[%c0_34, %c0_35, %c0_36, %c0_37], %92 {strides = array<i32>} : memref<1x4x8x8xbf16, #tpu.memory_space<vmem>>, vector<1x4x8x8xbf16>,
    return
  }
  func.func @transform_0(%arg0: i32, %arg1: i32) -> (i32, i32, i32, i32) {
    %c0_i32 = arith.constant 0 : i32
    %c0_i32_0 = arith.constant 0 : i32
    %c0_i32_1 = arith.constant 0 : i32
    return %arg0, %c0_i32, %arg1, %c0_i32_0 : i32, i32, i32, i32
  }
  func.func @transform_1(%arg0: i32, %arg1: i32) -> (i32, i32, i32, i32) {
    %c0_i32 = arith.constant 0 : i32
    %c0_i32_0 = arith.constant 0 : i32
    %c0_i32_1 = arith.constant 0 : i32
    %c0_i32_2 = arith.constant 0 : i32
    return %arg0, %c0_i32, %c0_i32_0, %c0_i32_1 : i32, i32, i32, i32
  }
  func.func @transform_2(%arg0: i32, %arg1: i32) -> (i32, i32, i32, i32) {
    %c0_i32 = arith.constant 0 : i32
    %c0_i32_0 = arith.constant 0 : i32
    %c0_i32_1 = arith.constant 0 : i32
    %c0_i32_2 = arith.constant 0 : i32
    return %arg0, %c0_i32, %c0_i32_0, %c0_i32_1 : i32, i32, i32, i32
  }
  func.func @transform_3(%arg0: i32, %arg1: i32) -> (i32, i32, i32) {
    %c0_i32 = arith.constant 0 : i32
    %c0_i32_0 = arith.constant 0 : i32
    %c0_i32_1 = arith.constant 0 : i32
    %c0_i32_2 = arith.constant 0 : i32
    return %c0_i32, %c0_i32_0, %c0_i32_1 : i32, i32, i32
  }
  func.func @transform_4(%arg0: i32, %arg1: i32) -> (i32, i32, i32) {
    %c0_i32 = arith.constant 0 : i32
    %c0_i32_0 = arith.constant 0 : i32
    %c0_i32_1 = arith.constant 0 : i32
    %c0_i32_2 = arith.constant 0 : i32
    return %c0_i32, %c0_i32_0, %c0_i32_1 : i32, i32, i32
  }
  func.func @transform_5(%arg0: i32, %arg1: i32) -> (i32, i32, i32) {
    %c0_i32 = arith.constant 0 : i32
    %c0_i32_0 = arith.constant 0 : i32
    %c0_i32_1 = arith.constant 0 : i32
    %c0_i32_2 = arith.constant 0 : i32
    return %c0_i32, %c0_i32_0, %c0_i32_1 : i32, i32, i32
  }
  func.func @transform_6(%arg0: i32, %arg1: i32) -> (i32, i32, i32, i32) {
    %c0_i32 = arith.constant 0 : i32
    %c0_i32_0 = arith.constant 0 : i32
    %c0_i32_1 = arith.constant 0 : i32
    return %arg0, %c0_i32, %arg1, %c0_i32_0 : i32, i32, i32, i32
  }
}

module attributes {stable_mosaic.version = 11 : i64} {
  func.func @_out_ln_kernel(%arg0: i32, %arg1: i32, %arg2: memref<1x4x8x8xbf16, #tpu.memory_space<vmem>>, %arg3: memref<1x8x32xf32, #tpu.memory_space<vmem>>, %arg4: memref<4x8x32xbf16, #tpu.memory_space<vmem>>, %arg5: memref<1x32xf32, #tpu.memory_space<vmem>>, %arg6: memref<1x32xf32, #tpu.memory_space<vmem>>, %arg7: memref<1x8x32xf32, #tpu.memory_space<vmem>>) attributes {dimension_semantics = [#tpu.dimension_semantics<parallel>, #tpu.dimension_semantics<parallel>], iteration_bounds = array<i64: 2, 1>, scalar_prefetch = 0 : i64, scratch_operands = 0 : i64, tpu.core_type = #tpu.core_type<tc>, window_params = [{transform_indices = @transform_0, window_bounds = array<i64: 1, 4, 8, 8>}, {transform_indices = @transform_1, window_bounds = array<i64: 1, 8, 32>}, {pipeline_mode = #tpu.pipeline_mode<synchronous>, transform_indices = @transform_2, window_bounds = array<i64: 4, 8, 32>}, {pipeline_mode = #tpu.pipeline_mode<synchronous>, transform_indices = @transform_3, window_bounds = array<i64: 1, 32>}, {pipeline_mode = #tpu.pipeline_mode<synchronous>, transform_indices = @transform_4, window_bounds = array<i64: 1, 32>}, {transform_indices = @transform_5, window_bounds = array<i64: 1, 8, 32>}]} {
    %c0 = arith.constant 0 : index
    %c0_0 = arith.constant 0 : index
    %c0_1 = arith.constant 0 : index
    %c0_2 = arith.constant 0 : index
    %0 = vector.load %arg2[%c0, %c0_0, %c0_1, %c0_2] : memref<1x4x8x8xbf16, #tpu.memory_space<vmem>>, vector<1x4x8x8xbf16>
    %1 = vector.shape_cast %0 : vector<1x4x8x8xbf16> to vector<4x8x8xbf16>
    %c0_3 = arith.constant 0 : index
    %c0_4 = arith.constant 0 : index
    %c0_5 = arith.constant 0 : index
    %2 = vector.load %arg4[%c0_3, %c0_4, %c0_5] : memref<4x8x32xbf16, #tpu.memory_space<vmem>>, vector<4x8x32xbf16>
    %3 = vector.extract_strided_slice %1 {offsets = [0, 0, 0], sizes = [1, 8, 8], strides = [1, 1, 1]} : vector<4x8x8xbf16> to vector<1x8x8xbf16>
    %4 = vector.shape_cast %3 : vector<1x8x8xbf16> to vector<8x8xbf16>
    %5 = vector.extract_strided_slice %2 {offsets = [0, 0, 0], sizes = [1, 8, 32], strides = [1, 1, 1]} : vector<4x8x32xbf16> to vector<1x8x32xbf16>
    %6 = vector.shape_cast %5 : vector<1x8x32xbf16> to vector<8x32xbf16>
    %cst = arith.constant dense<0.000000e+00> : vector<8x32xf32>
    %7 = tpu.matmul %4, %6, %cst {dimension_numbers = #tpu.dot_dimension_numbers<[1], [0], [0], [1], [0, 0, 1, 1], [], []>} : vector<8x8xbf16>, vector<8x32xbf16>, vector<8x32xf32> -> vector<8x32xf32>
    %8 = vector.extract_strided_slice %1 {offsets = [1, 0, 0], sizes = [1, 8, 8], strides = [1, 1, 1]} : vector<4x8x8xbf16> to vector<1x8x8xbf16>
    %9 = vector.shape_cast %8 : vector<1x8x8xbf16> to vector<8x8xbf16>
    %10 = vector.extract_strided_slice %2 {offsets = [1, 0, 0], sizes = [1, 8, 32], strides = [1, 1, 1]} : vector<4x8x32xbf16> to vector<1x8x32xbf16>
    %11 = vector.shape_cast %10 : vector<1x8x32xbf16> to vector<8x32xbf16>
    %cst_6 = arith.constant dense<0.000000e+00> : vector<8x32xf32>
    %12 = tpu.matmul %9, %11, %cst_6 {dimension_numbers = #tpu.dot_dimension_numbers<[1], [0], [0], [1], [0, 0, 1, 1], [], []>} : vector<8x8xbf16>, vector<8x32xbf16>, vector<8x32xf32> -> vector<8x32xf32>
    %13 = arith.addf %7, %12 : vector<8x32xf32>
    %14 = vector.extract_strided_slice %1 {offsets = [2, 0, 0], sizes = [1, 8, 8], strides = [1, 1, 1]} : vector<4x8x8xbf16> to vector<1x8x8xbf16>
    %15 = vector.shape_cast %14 : vector<1x8x8xbf16> to vector<8x8xbf16>
    %16 = vector.extract_strided_slice %2 {offsets = [2, 0, 0], sizes = [1, 8, 32], strides = [1, 1, 1]} : vector<4x8x32xbf16> to vector<1x8x32xbf16>
    %17 = vector.shape_cast %16 : vector<1x8x32xbf16> to vector<8x32xbf16>
    %cst_7 = arith.constant dense<0.000000e+00> : vector<8x32xf32>
    %18 = tpu.matmul %15, %17, %cst_7 {dimension_numbers = #tpu.dot_dimension_numbers<[1], [0], [0], [1], [0, 0, 1, 1], [], []>} : vector<8x8xbf16>, vector<8x32xbf16>, vector<8x32xf32> -> vector<8x32xf32>
    %19 = arith.addf %13, %18 : vector<8x32xf32>
    %20 = vector.extract_strided_slice %1 {offsets = [3, 0, 0], sizes = [1, 8, 8], strides = [1, 1, 1]} : vector<4x8x8xbf16> to vector<1x8x8xbf16>
    %21 = vector.shape_cast %20 : vector<1x8x8xbf16> to vector<8x8xbf16>
    %22 = vector.extract_strided_slice %2 {offsets = [3, 0, 0], sizes = [1, 8, 32], strides = [1, 1, 1]} : vector<4x8x32xbf16> to vector<1x8x32xbf16>
    %23 = vector.shape_cast %22 : vector<1x8x32xbf16> to vector<8x32xbf16>
    %cst_8 = arith.constant dense<0.000000e+00> : vector<8x32xf32>
    %24 = tpu.matmul %21, %23, %cst_8 {dimension_numbers = #tpu.dot_dimension_numbers<[1], [0], [0], [1], [0, 0, 1, 1], [], []>} : vector<8x8xbf16>, vector<8x32xbf16>, vector<8x32xf32> -> vector<8x32xf32>
    %25 = arith.addf %19, %24 : vector<8x32xf32>
    %c0_9 = arith.constant 0 : index
    %c0_10 = arith.constant 0 : index
    %c0_11 = arith.constant 0 : index
    %26 = vector.load %arg3[%c0_9, %c0_10, %c0_11] : memref<1x8x32xf32, #tpu.memory_space<vmem>>, vector<1x8x32xf32>
    %27 = vector.shape_cast %26 : vector<1x8x32xf32> to vector<8x32xf32>
    %28 = arith.addf %27, %25 : vector<8x32xf32>
    %cst_12 = arith.constant dense<0.000000e+00> : vector<8xf32>
    %29 = vector.multi_reduction <add>, %28, %cst_12 [1] : vector<8x32xf32> to vector<8xf32>
    %30 = vector.shape_cast %29 : vector<8xf32> to vector<8x1xf32>
    %cst_13 = arith.constant 3.200000e+01 : f32
    %31 = vector.broadcast %cst_13 : f32 to vector<8x1xf32>
    %32 = arith.divf %30, %31 : vector<8x1xf32>
    %33 = vector.broadcast %32 : vector<8x1xf32> to vector<8x32xf32>
    %34 = arith.subf %28, %33 : vector<8x32xf32>
    %35 = arith.mulf %34, %34 : vector<8x32xf32>
    %cst_14 = arith.constant dense<0.000000e+00> : vector<8xf32>
    %36 = vector.multi_reduction <add>, %35, %cst_14 [1] : vector<8x32xf32> to vector<8xf32>
    %37 = vector.shape_cast %36 : vector<8xf32> to vector<8x1xf32>
    %cst_15 = arith.constant 3.200000e+01 : f32
    %38 = vector.broadcast %cst_15 : f32 to vector<8x1xf32>
    %39 = arith.divf %37, %38 : vector<8x1xf32>
    %40 = vector.broadcast %32 : vector<8x1xf32> to vector<8x32xf32>
    %41 = arith.subf %28, %40 : vector<8x32xf32>
    %cst_16 = arith.constant 9.99999974E-6 : f32
    %42 = vector.broadcast %cst_16 : f32 to vector<8x1xf32>
    %43 = arith.addf %39, %42 : vector<8x1xf32>
    %44 = math.rsqrt %43 : vector<8x1xf32>
    %45 = vector.broadcast %44 : vector<8x1xf32> to vector<8x32xf32>
    %46 = arith.mulf %41, %45 : vector<8x32xf32>
    %c0_17 = arith.constant 0 : index
    %c0_18 = arith.constant 0 : index
    %47 = vector.load %arg5[%c0_17, %c0_18] : memref<1x32xf32, #tpu.memory_space<vmem>>, vector<1x32xf32>
    %48 = vector.broadcast %47 : vector<1x32xf32> to vector<8x32xf32>
    %49 = arith.mulf %46, %48 : vector<8x32xf32>
    %c0_19 = arith.constant 0 : index
    %c0_20 = arith.constant 0 : index
    %50 = vector.load %arg6[%c0_19, %c0_20] : memref<1x32xf32, #tpu.memory_space<vmem>>, vector<1x32xf32>
    %51 = vector.broadcast %50 : vector<1x32xf32> to vector<8x32xf32>
    %52 = arith.addf %49, %51 : vector<8x32xf32>
    %c0_21 = arith.constant 0 : index
    %c0_22 = arith.constant 0 : index
    %c0_23 = arith.constant 0 : index
    %53 = vector.load %arg7[%c0_21, %c0_22, %c0_23] : memref<1x8x32xf32, #tpu.memory_space<vmem>>, vector<1x8x32xf32>
    %54 = vector.shape_cast %53 : vector<1x8x32xf32> to vector<8x32xf32>
    %55 = vector.shape_cast %52 : vector<8x32xf32> to vector<1x8x32xf32>
    tpu.vector_store %arg7[%c0_21, %c0_22, %c0_23], %55 {strides = array<i32>} : memref<1x8x32xf32, #tpu.memory_space<vmem>>, vector<1x8x32xf32>,
    return
  }
  func.func @transform_0(%arg0: i32, %arg1: i32) -> (i32, i32, i32, i32) {
    %c0_i32 = arith.constant 0 : i32
    %c0_i32_0 = arith.constant 0 : i32
    %c0_i32_1 = arith.constant 0 : i32
    return %arg0, %c0_i32, %arg1, %c0_i32_0 : i32, i32, i32, i32
  }
  func.func @transform_1(%arg0: i32, %arg1: i32) -> (i32, i32, i32) {
    %c0_i32 = arith.constant 0 : i32
    %c0_i32_0 = arith.constant 0 : i32
    return %arg0, %arg1, %c0_i32 : i32, i32, i32
  }
  func.func @transform_2(%arg0: i32, %arg1: i32) -> (i32, i32, i32) {
    %c0_i32 = arith.constant 0 : i32
    %c0_i32_0 = arith.constant 0 : i32
    %c0_i32_1 = arith.constant 0 : i32
    %c0_i32_2 = arith.constant 0 : i32
    return %c0_i32, %c0_i32_0, %c0_i32_1 : i32, i32, i32
  }
  func.func @transform_3(%arg0: i32, %arg1: i32) -> (i32, i32) {
    %c0_i32 = arith.constant 0 : i32
    %c0_i32_0 = arith.constant 0 : i32
    %c0_i32_1 = arith.constant 0 : i32
    return %c0_i32, %c0_i32_0 : i32, i32
  }
  func.func @transform_4(%arg0: i32, %arg1: i32) -> (i32, i32) {
    %c0_i32 = arith.constant 0 : i32
    %c0_i32_0 = arith.constant 0 : i32
    %c0_i32_1 = arith.constant 0 : i32
    return %c0_i32, %c0_i32_0 : i32, i32
  }
  func.func @transform_5(%arg0: i32, %arg1: i32) -> (i32, i32, i32) {
    %c0_i32 = arith.constant 0 : i32
    %c0_i32_0 = arith.constant 0 : i32
    return %arg0, %arg1, %c0_i32 : i32, i32, i32
  }
}

</mosaic_0001>

<llo_original>
// kernel: rel_partial_mha_forward.7
$region0: #{rel_partial_mha_forward.7}
  #allocation0 [shape = 'u32[]', space=smem, size = 0x4, offset = 0x4, fixed_abs, tag = 'smem constant byte address 0x4 - core index']
  #allocation1 [shape = 'u32[144,128]{1,0:T(1,128)}', space=vmem, size = 0x12000, scoped, tag = 'internal scratch']
  #allocation2 [shape = 'f32[16,32]{1,0:T(8,128)}', space=vmem, size = 0x2000, scoped, tag = 'scratch operand']
  %s0 = inlined_call_operand.vmem [shape: bf16[16,32], index: 0, kind: input, shape index: {}]
  %s1 = inlined_call_operand.vmem [shape: bf16[32,32], index: 1, kind: input, shape index: {}]
  %s2 = inlined_call_operand.vmem [shape: bf16[16,32], index: 2, kind: output, shape index: {}]
  %s3 = sld [smem:[#allocation0]]
  $region26: #{rel_partial_mha_forward.7} parent=0
    _
  %s5 = ssub.s32 1, %s3
  %s6 = scalar_select 0, %s5, %s3
  // Predicated region
  $region2: #{rel_partial_mha_forward.7} parent=0 // pred_check
    _
  $region3: #{rel_partial_mha_forward.7} parent=0 // pred_check_branch
    %8 = sbr.rel (0) target = $region5
  $region4: #{rel_partial_mha_forward.7} parent=0 // pred_region
    _
  $region5: #{rel_partial_mha_forward.7} parent=0 // pred_fallthru
    _
  // Predicated region
  $region6: #{rel_partial_mha_forward.7} parent=0 // pred_check
    _
  $region7: #{rel_partial_mha_forward.7} parent=0 // pred_check_branch
    %10 = sbr.rel (0) target = $region9
  $region8: #{rel_partial_mha_forward.7} parent=0 // pred_region
    _
  $region9: #{rel_partial_mha_forward.7} parent=0 // pred_fallthru
    _
  %p12 = scmp.eq.s32.totalorder 0, 0
  // Predicated region
  $region10: #{rel_partial_mha_forward.7} parent=0 // pred_check
    %p13 = pneg %p12
  $region11: #{rel_partial_mha_forward.7} parent=0 // pred_check_branch
    %15 = sbr.rel (%p13) target = $region13
  $region12: #{rel_partial_mha_forward.7} parent=0 // pred_region
    %vm16 = vcmask 261120
    %17 = vst.msk [vmem:[#allocation2] sm:$0xff] %vm16, 0.0
    %18 = vst.msk [vmem:[#allocation2 + $0x8] sm:$0xff] %vm16, 0.0
  $region13: #{rel_partial_mha_forward.7} parent=0 // pred_fallthru
    _
  %v19 = vld [vmem:[#allocation2] sm:$0xff]
  %v20 = vld [vmem:[#allocation2 + $0x8] sm:$0xff]
  %v21 = vld [vmem:[%s0] sm:$0xf]
  %v22 = vld [vmem:[%s0 + $0x4] sm:$0xf]
  %v23 = vld [vmem:[%s1] sm:$0xf]
  %v24 = vld [vmem:[%s1 + $0x4] sm:$0xf]
  %v25 = vld [vmem:[%s1 + $0x8] sm:$0xf]
  %v26 = vld [vmem:[%s1 + $0xc] sm:$0xf]
  %v29 = vunpack.c.l.b16 %v21
  %v30 = vunpack.c.l.b16 %v22
  %v31 = vpack.c.b16 %v30, %v29
  %v36 = vunpack.c.l.b16 %v23
  %v37 = vunpack.c.l.b16 %v24
  %v38 = vunpack.c.l.b16 %v25
  %v39 = vunpack.c.l.b16 %v26
  %v40 = vpack.c.b16 %v37, %v36
  %v41 = vpack.c.b16 %v39, %v38
  %vm44 = vcmask 261120
  %v46 = vsel %vm44, %v31, 0
  %48 = vmatprep.subr.bf16.mxu0 0
  %49 = vmatpush1.bf16.msra.mxu0 0
  %50 = vmatprep.subr.bf16.mxu0 0
  %51 = vmatpush1.bf16.msra.mxu0 0
  %52 = vmatprep.subr.bf16.mxu0 0
  %53 = vmatpush1.bf16.msra.mxu0 0
  %54 = vmatprep.subr.bf16.mxu0 0
  %55 = vmatpush1.bf16.msra.mxu0 0
  %56 = vmatprep.subr.bf16.mxu0 0
  %57 = vmatpush1.bf16.msra.mxu0 0
  %58 = vmatprep.subr.bf16.mxu0 0
  %59 = vmatpush1.bf16.msra.mxu0 0
  %60 = vmatprep.subr.bf16.mxu0 0
  %61 = vmatpush1.bf16.msra.mxu0 %v41
  %62 = vmatprep.subr.bf16.mxu0 0
  %63 = vmatpush1.bf16.msra.mxu0 %v40
  %64 = vmatprep.subr.bf16.mxu0 0
  %65 = vmatpush2.bf16.msra.mxu0 0
  %66 = vmatprep.subr.bf16.mxu0 0
  %67 = vmatpush2.bf16.msra.mxu0 0
  %68 = vmatprep.subr.bf16.mxu0 0
  %69 = vmatpush2.bf16.msra.mxu0 0
  %70 = vmatprep.subr.bf16.mxu0 0
  %71 = vmatpush2.bf16.msra.mxu0 0
  %72 = vmatprep.subr.bf16.mxu0 0
  %73 = vmatpush2.bf16.msra.mxu0 0
  %74 = vmatprep.subr.bf16.mxu0 0
  %75 = vmatpush2.bf16.msra.mxu0 0
  %76 = vmatprep.subr.bf16.mxu0 0
  %77 = vmatpush2.bf16.msra.mxu0 0
  %78 = vmatprep.subr.bf16.mxu0 0
  %79 = vmatpush2.bf16.msra.mxu0 0
  %80 = vmatprep.mubr.bf16.mxu0 0
  %81 = vmatmul.mubr.bf16.gmra.mxu0 %v46
  %v82 = vpop.f32.mrf.mxu0
  %v83 = vadd.f32 0.0, %v82
  %v84 = vpop.f32.mrf.mxu0
  %v85 = vpop.f32.mrf.mxu0
  %v86 = vadd.f32 0.0, %v85
  %v87 = vpop.f32.mrf.mxu0
  %88 = vdwg.mxu0
  %v89 = vadd.f32 %v19, %v83
  %v90 = vadd.f32 %v20, %v86
  %91 = vst.msk [vmem:[#allocation2] sm:$0xff] %vm44, %v89
  %92 = vst.msk [vmem:[#allocation2 + $0x8] sm:$0xff] %vm44, %v90
  // Predicated region
  $region14: #{rel_partial_mha_forward.7} parent=0 // pred_check
    %p93 = pneg %p12
  $region15: #{rel_partial_mha_forward.7} parent=0 // pred_check_branch
    %95 = sbr.rel (%p93) target = $region17
  $region16: #{rel_partial_mha_forward.7} parent=0 // pred_region
    %v96 = vld [vmem:[#allocation2] sm:$0xff]
    %v97 = vld [vmem:[#allocation2 + $0x8] sm:$0xff]
    %v98 = vpack.c.bf16 %v97, %v96
    %v100 = vunpack.c.l.b16 %v98
    %v101 = vunpack.c.h.b16 %v98
    %v102 = vpack.c.b16 %v100, %v100
    %v103 = vpack.c.b16 %v101, %v101
    %vm106 = vcmask 257024
    %107 = vst.msk [vmem:[%s2] sm:$0xf] %vm106, %v102
    %108 = vst.msk [vmem:[%s2 + $0x4] sm:$0xf] %vm106, %v103
  $region17: #{rel_partial_mha_forward.7} parent=0 // pred_fallthru
    _
  // Predicated region
  $region18: #{rel_partial_mha_forward.7} parent=0 // pred_check
    _
  $region19: #{rel_partial_mha_forward.7} parent=0 // pred_check_branch
    %110 = sbr.rel (0) target = $region21
  $region20: #{rel_partial_mha_forward.7} parent=0 // pred_region
    _
  $region21: #{rel_partial_mha_forward.7} parent=0 // pred_fallthru
    _
  // Predicated region
  $region22: #{rel_partial_mha_forward.7} parent=0 // pred_check
    _
  $region23: #{rel_partial_mha_forward.7} parent=0 // pred_check_branch
    %112 = sbr.rel (0) target = $region25
  $region24: #{rel_partial_mha_forward.7} parent=0 // pred_region
    _
  $region25: #{rel_partial_mha_forward.7} parent=0 // pred_fallthru
    _

// kernel: rel_partial_mha_forward.9
$region0: #{rel_partial_mha_forward.9}
  #allocation0 [shape = 'u32[]', space=smem, size = 0x4, offset = 0x4, fixed_abs, tag = 'smem constant byte address 0x4 - core index']
  #allocation1 [shape = 'u32[144,128]{1,0:T(1,128)}', space=vmem, size = 0x12000, scoped, tag = 'internal scratch']
  #allocation2 [shape = 'f32[8,32]{1,0:T(8,128)}', space=vmem, size = 0x1000, scoped, tag = 'scratch operand']
  %s0 = inlined_call_operand.vmem [shape: bf16[8,32], index: 0, kind: input, shape index: {}]
  %s1 = inlined_call_operand.vmem [shape: bf16[32,32], index: 1, kind: input, shape index: {}]
  %s2 = inlined_call_operand.vmem [shape: bf16[8,32], index: 2, kind: output, shape index: {}]
  %s3 = sld [smem:[#allocation0]]
  $region26: #{rel_partial_mha_forward.9} parent=0
    _
  %s5 = ssub.s32 1, %s3
  %s6 = scalar_select 0, %s5, %s3
  // Predicated region
  $region2: #{rel_partial_mha_forward.9} parent=0 // pred_check
    _
  $region3: #{rel_partial_mha_forward.9} parent=0 // pred_check_branch
    %8 = sbr.rel (0) target = $region5
  $region4: #{rel_partial_mha_forward.9} parent=0 // pred_region
    _
  $region5: #{rel_partial_mha_forward.9} parent=0 // pred_fallthru
    _
  // Predicated region
  $region6: #{rel_partial_mha_forward.9} parent=0 // pred_check
    _
  $region7: #{rel_partial_mha_forward.9} parent=0 // pred_check_branch
    %10 = sbr.rel (0) target = $region9
  $region8: #{rel_partial_mha_forward.9} parent=0 // pred_region
    _
  $region9: #{rel_partial_mha_forward.9} parent=0 // pred_fallthru
    _
  %p12 = scmp.eq.s32.totalorder 0, 0
  // Predicated region
  $region10: #{rel_partial_mha_forward.9} parent=0 // pred_check
    %p13 = pneg %p12
  $region11: #{rel_partial_mha_forward.9} parent=0 // pred_check_branch
    %15 = sbr.rel (%p13) target = $region13
  $region12: #{rel_partial_mha_forward.9} parent=0 // pred_region
    %vm16 = vcmask 261120
    %17 = vst.msk [vmem:[#allocation2] sm:$0xff] %vm16, 0.0
  $region13: #{rel_partial_mha_forward.9} parent=0 // pred_fallthru
    _
  %v18 = vld [vmem:[#allocation2] sm:$0xff]
  %v19 = vld [vmem:[%s0] sm:$0xf]
  %v20 = vld [vmem:[%s1] sm:$0xf]
  %v21 = vld [vmem:[%s1 + $0x4] sm:$0xf]
  %v22 = vld [vmem:[%s1 + $0x8] sm:$0xf]
  %v23 = vld [vmem:[%s1 + $0xc] sm:$0xf]
  %v28 = vunpack.c.l.b16 %v20
  %v29 = vunpack.c.l.b16 %v21
  %v30 = vunpack.c.l.b16 %v22
  %v31 = vunpack.c.l.b16 %v23
  %v32 = vpack.c.b16 %v29, %v28
  %v33 = vpack.c.b16 %v31, %v30
  %vm36 = vcmask 261120
  %v38 = vsel %vm36, %v19, 0
  %40 = vmatprep.subr.bf16.mxu0 0
  %41 = vmatpush1.bf16.msra.mxu0 0
  %42 = vmatprep.subr.bf16.mxu0 0
  %43 = vmatpush1.bf16.msra.mxu0 0
  %44 = vmatprep.subr.bf16.mxu0 0
  %45 = vmatpush1.bf16.msra.mxu0 0
  %46 = vmatprep.subr.bf16.mxu0 0
  %47 = vmatpush1.bf16.msra.mxu0 0
  %48 = vmatprep.subr.bf16.mxu0 0
  %49 = vmatpush1.bf16.msra.mxu0 0
  %50 = vmatprep.subr.bf16.mxu0 0
  %51 = vmatpush1.bf16.msra.mxu0 0
  %52 = vmatprep.subr.bf16.mxu0 0
  %53 = vmatpush1.bf16.msra.mxu0 %v33
  %54 = vmatprep.subr.bf16.mxu0 0
  %55 = vmatpush1.bf16.msra.mxu0 %v32
  %56 = vmatprep.subr.bf16.mxu0 0
  %57 = vmatpush2.bf16.msra.mxu0 0
  %58 = vmatprep.subr.bf16.mxu0 0
  %59 = vmatpush2.bf16.msra.mxu0 0
  %60 = vmatprep.subr.bf16.mxu0 0
  %61 = vmatpush2.bf16.msra.mxu0 0
  %62 = vmatprep.subr.bf16.mxu0 0
  %63 = vmatpush2.bf16.msra.mxu0 0
  %64 = vmatprep.subr.bf16.mxu0 0
  %65 = vmatpush2.bf16.msra.mxu0 0
  %66 = vmatprep.subr.bf16.mxu0 0
  %67 = vmatpush2.bf16.msra.mxu0 0
  %68 = vmatprep.subr.bf16.mxu0 0
  %69 = vmatpush2.bf16.msra.mxu0 0
  %70 = vmatprep.subr.bf16.mxu0 0
  %71 = vmatpush2.bf16.msra.mxu0 0
  %72 = vmatprep.mubr.bf16.mxu0 0
  %73 = vmatmul.mubr.bf16.gmra.mxu0 %v38
  %v74 = vpop.f32.mrf.mxu0
  %v75 = vadd.f32 0.0, %v74
  %v76 = vpop.f32.mrf.mxu0
  %v77 = vpop.f32.mrf.mxu0
  %v78 = vpop.f32.mrf.mxu0
  %79 = vdwg.mxu0
  %v80 = vadd.f32 %v18, %v75
  %81 = vst.msk [vmem:[#allocation2] sm:$0xff] %vm36, %v80
  // Predicated region
  $region14: #{rel_partial_mha_forward.9} parent=0 // pred_check
    %p82 = pneg %p12
  $region15: #{rel_partial_mha_forward.9} parent=0 // pred_check_branch
    %84 = sbr.rel (%p82) target = $region17
  $region16: #{rel_partial_mha_forward.9} parent=0 // pred_region
    %v85 = vld [vmem:[#allocation2] sm:$0xff]
    %v86 = vpack.c.bf16 %v85, %v85
    %vm87 = vcmask 257024
    %88 = vst.msk [vmem:[%s2] sm:$0xf] %vm87, %v86
  $region17: #{rel_partial_mha_forward.9} parent=0 // pred_fallthru
    _
  // Predicated region
  $region18: #{rel_partial_mha_forward.9} parent=0 // pred_check
    _
  $region19: #{rel_partial_mha_forward.9} parent=0 // pred_check_branch
    %90 = sbr.rel (0) target = $region21
  $region20: #{rel_partial_mha_forward.9} parent=0 // pred_region
    _
  $region21: #{rel_partial_mha_forward.9} parent=0 // pred_fallthru
    _
  // Predicated region
  $region22: #{rel_partial_mha_forward.9} parent=0 // pred_check
    _
  $region23: #{rel_partial_mha_forward.9} parent=0 // pred_check_branch
    %92 = sbr.rel (0) target = $region25
  $region24: #{rel_partial_mha_forward.9} parent=0 // pred_region
    _
  $region25: #{rel_partial_mha_forward.9} parent=0 // pred_fallthru
    _

// kernel: rel_partial_mha_forward.11
$region0: #{rel_partial_mha_forward.11}
  #allocation0 [shape = 'u32[]', space=smem, size = 0x4, offset = 0x4, fixed_abs, tag = 'smem constant byte address 0x4 - core index']
  #allocation1 [shape = 'u32[144,128]{1,0:T(1,128)}', space=vmem, size = 0x12000, scoped, tag = 'internal scratch']
  %s0 = inlined_call_operand.vmem [shape: bf16[2,4,8,8], index: 0, kind: input, shape index: {}]
  %s1 = inlined_call_operand.vmem [shape: f32[2,8,32], index: 1, kind: input, shape index: {}]
  %s2 = inlined_call_operand.vmem [shape: bf16[4,8,32], index: 2, kind: input, shape index: {}]
  %s3 = inlined_call_operand.vmem [shape: f32[1,32], index: 3, kind: input, shape index: {}]
  %s4 = inlined_call_operand.vmem [shape: f32[1,32], index: 4, kind: input, shape index: {}]
  %s5 = inlined_call_operand.vmem [shape: f32[2,8,32], index: 5, kind: output, shape index: {}]
  %s6 = sld [smem:[#allocation0]]
  $region53: #{rel_partial_mha_forward.11} parent=0
    _
  %s8 = ssub.s32 1, %s6
  %s9 = scalar_select 0, %s8, %s6
  loop: start=0, step=1, limit=4
  $region2: #{rel_partial_mha_forward.11} parent=0 // loop_pre_header
    _
  $region3: #{rel_partial_mha_forward.11} parent=0 // loop_header
    %s11 = sphi 0, %s15
    %p12 = scmp.ge.s32.totalorder %s11, 4
    %s18 = sphi 0, %s30
    %s19 = sphi 0, %s26
    %s20 = sphi 0, %s18
    %s21 = sphi 0, %s19
    %s22 = sphi 0, %s20
    %s23 = sphi 0, %s21
    %s35 = sphi 0, %s37
    %s38 = sphi 0, %s35
    %s39 = sphi 0, %s38
    %s55 = sphi 0, %s39
    %s63 = sphi 0, %s65
    %s66 = sphi 0, %s63
    %s67 = sphi 0, %s66
    %s83 = sphi 0, %s67
    %s87 = sphi 0, %s87
    %s89 = sphi 0, %s87
    %s90 = sphi 0, %s89
    %s104 = sphi 0, %s90
    %s108 = sphi 0, %s108
    %s110 = sphi 0, %s108
    %s111 = sphi 0, %s110
    %s125 = sphi 0, %s111
    %s129 = sphi 0, %s129
    %s131 = sphi 0, %s129
    %s132 = sphi 0, %s131
    %s146 = sphi 0, %s132
    %s154 = sphi 0, %s156
    %s157 = sphi 0, %s154
    %s158 = sphi 0, %s157
    %s174 = sphi 0, %s158
  $region4: #{rel_partial_mha_forward.11} parent=0 // loop_header_branch
    %14 = sbr.rel (%p12) target = $region8
  $region5: #{rel_partial_mha_forward.11} parent=0 // loop_body
    %s16 = ssub.s32 %s11, 1
    %s17 = ssub.s32 %s11, 2
    %s24 = sadd.s32 1, %s19
    %p25 = scmp.ge.s32.totalorder %s24, 1
    %s26 = scalar_select %p25, 0, %s24
    %s27 = sadd.s32 1, %s18
    %s28 = scalar_select %p25, %s27, %s18
    %p29 = scmp.ge.s32.totalorder %s28, 2
    %s30 = scalar_select %p29, 0, %s28
    %s31 = ssub.s32 %s18, %s30
    %s32 = ssub.s32 %s19, %s26
    %s33 = sor.u32 %s31, %s32
    %p34 = scmp.eq.s32.totalorder %s33, 0
    %s36 = sadd.s32 %s35, 1
    %s37 = scalar_select %p34, %s35, %s36
    %p40 = pneg %p34
    %p41 = scmp.eq.s32.totalorder %s11, 1
    %p42 = por %p40, %p41
    %p43 = scmp.ne.s32.totalorder %s35, %s38
    %p44 = scmp.eq.s32.totalorder %s11, 0
    %p45 = por %p43, %p44
    %p46 = scmp.ne.s32.totalorder %s35, %s38
    %p47 = scmp.eq.s32.totalorder %s16, 1
    %p48 = por %p46, %p47
    %p49 = scmp.ne.s32.totalorder %s38, %s39
    %p50 = scmp.eq.s32.totalorder %s16, 0
    %p51 = por %p49, %p50
    %p52 = scmp.ne.s32.totalorder %s38, %s39
    %p53 = scmp.eq.s32.totalorder %s17, 1
    %p54 = por %p52, %p53
    %p56 = scmp.ne.s32.totalorder %s39, %s55
    %p57 = scmp.eq.s32.totalorder %s17, 0
    %p58 = por %p56, %p57
    %s59 = ssub.s32 %s18, %s30
    %s60 = ssub.s32 %s19, %s26
    %s61 = sor.u32 %s59, %s60
    %p62 = scmp.eq.s32.totalorder %s61, 0
    %s64 = sadd.s32 %s63, 1
    %s65 = scalar_select %p62, %s63, %s64
    %p68 = pneg %p62
    %p69 = scmp.eq.s32.totalorder %s11, 1
    %p70 = por %p68, %p69
    %p71 = scmp.ne.s32.totalorder %s63, %s66
    %p72 = scmp.eq.s32.totalorder %s11, 0
    %p73 = por %p71, %p72
    %p74 = scmp.ne.s32.totalorder %s63, %s66
    %p75 = scmp.eq.s32.totalorder %s16, 1
    %p76 = por %p74, %p75
    %p77 = scmp.ne.s32.totalorder %s66, %s67
    %p78 = scmp.eq.s32.totalorder %s16, 0
    %p79 = por %p77, %p78
    %p80 = scmp.ne.s32.totalorder %s66, %s67
    %p81 = scmp.eq.s32.totalorder %s17, 1
    %p82 = por %p80, %p81
    %p84 = scmp.ne.s32.totalorder %s67, %s83
    %p85 = scmp.eq.s32.totalorder %s17, 0
    %p86 = por %p84, %p85
    %s88 = sadd.s32 %s87, 1
    %p91 = scmp.eq.s32.totalorder %s11, 1
    %p92 = scmp.ne.s32.totalorder %s87, %s89
    %p93 = scmp.eq.s32.totalorder %s11, 0
    %p94 = por %p92, %p93
    %p95 = scmp.ne.s32.totalorder %s87, %s89
    %p96 = scmp.eq.s32.totalorder %s16, 1
    %p97 = por %p95, %p96
    %p98 = scmp.ne.s32.totalorder %s89, %s90
    %p99 = scmp.eq.s32.totalorder %s16, 0
    %p100 = por %p98, %p99
    %p101 = scmp.ne.s32.totalorder %s89, %s90
    %p102 = scmp.eq.s32.totalorder %s17, 1
    %p103 = por %p101, %p102
    %p105 = scmp.ne.s32.totalorder %s90, %s104
    %p106 = scmp.eq.s32.totalorder %s17, 0
    %p107 = por %p105, %p106
    %s109 = sadd.s32 %s108, 1
    %p112 = scmp.eq.s32.totalorder %s11, 1
    %p113 = scmp.ne.s32.totalorder %s108, %s110
    %p114 = scmp.eq.s32.totalorder %s11, 0
    %p115 = por %p113, %p114
    %p116 = scmp.ne.s32.totalorder %s108, %s110
    %p117 = scmp.eq.s32.totalorder %s16, 1
    %p118 = por %p116, %p117
    %p119 = scmp.ne.s32.totalorder %s110, %s111
    %p120 = scmp.eq.s32.totalorder %s16, 0
    %p121 = por %p119, %p120
    %p122 = scmp.ne.s32.totalorder %s110, %s111
    %p123 = scmp.eq.s32.totalorder %s17, 1
    %p124 = por %p122, %p123
    %p126 = scmp.ne.s32.totalorder %s111, %s125
    %p127 = scmp.eq.s32.totalorder %s17, 0
    %p128 = por %p126, %p127
    %s130 = sadd.s32 %s129, 1
    %p133 = scmp.eq.s32.totalorder %s11, 1
    %p134 = scmp.ne.s32.totalorder %s129, %s131
    %p135 = scmp.eq.s32.totalorder %s11, 0
    %p136 = por %p134, %p135
    %p137 = scmp.ne.s32.totalorder %s129, %s131
    %p138 = scmp.eq.s32.totalorder %s16, 1
    %p139 = por %p137, %p138
    %p140 = scmp.ne.s32.totalorder %s131, %s132
    %p141 = scmp.eq.s32.totalorder %s16, 0
    %p142 = por %p140, %p141
    %p143 = scmp.ne.s32.totalorder %s131, %s132
    %p144 = scmp.eq.s32.totalorder %s17, 1
    %p145 = por %p143, %p144
    %p147 = scmp.ne.s32.totalorder %s132, %s146
    %p148 = scmp.eq.s32.totalorder %s17, 0
    %p149 = por %p147, %p148
    %s150 = ssub.s32 %s18, %s30
    %s151 = ssub.s32 %s19, %s26
    %s152 = sor.u32 %s150, %s151
    %p153 = scmp.eq.s32.totalorder %s152, 0
    %s155 = sadd.s32 %s154, 1
    %s156 = scalar_select %p153, %s154, %s155
    %p159 = pneg %p153
    %p160 = scmp.eq.s32.totalorder %s11, 1
    %p161 = por %p159, %p160
    %p162 = scmp.ne.s32.totalorder %s154, %s157
    %p163 = scmp.eq.s32.totalorder %s11, 0
    %p164 = por %p162, %p163
    %p165 = scmp.ne.s32.totalorder %s154, %s157
    %p166 = scmp.eq.s32.totalorder %s16, 1
    %p167 = por %p165, %p166
    %p168 = scmp.ne.s32.totalorder %s157, %s158
    %p169 = scmp.eq.s32.totalorder %s16, 0
    %p170 = por %p168, %p169
    %p171 = scmp.ne.s32.totalorder %s157, %s158
    %p172 = scmp.eq.s32.totalorder %s17, 1
    %p173 = por %p171, %p172
    %p175 = scmp.ne.s32.totalorder %s158, %s174
    %p176 = scmp.eq.s32.totalorder %s17, 0
    %p177 = por %p175, %p176
    %p178 = scmp.le.s32.totalorder 1, %s11
    %p179 = scmp.lt.s32.totalorder %s11, 3
    %p180 = pnand %p178, %p179
    %p181 = pneg %p180
    // Predicated region
    $region9: #{rel_partial_mha_forward.11} parent=5 // pred_check
      _
    $region10: #{rel_partial_mha_forward.11} parent=5 // pred_check_branch
      %183 = sbr.rel (%p180) target = $region12
    $region11: #{rel_partial_mha_forward.11} parent=5 // pred_region
      %s184 = ssub.s32 %s11, 1
      // Predicated region
      $region13: #{rel_partial_mha_forward.11} parent=11 // pred_check
        %p185 = pneg %p100
      $region14: #{rel_partial_mha_forward.11} parent=11 // pred_check_branch
        %187 = sbr.rel (%p185) target = $region16
      $region15: #{rel_partial_mha_forward.11} parent=11 // pred_region
        _
      $region16: #{rel_partial_mha_forward.11} parent=11 // pred_fallthru
        _
      // Predicated region
      $region17: #{rel_partial_mha_forward.11} parent=11 // pred_check
        %p188 = pneg %p121
      $region18: #{rel_partial_mha_forward.11} parent=11 // pred_check_branch
        %190 = sbr.rel (%p188) target = $region20
      $region19: #{rel_partial_mha_forward.11} parent=11 // pred_region
        _
      $region20: #{rel_partial_mha_forward.11} parent=11 // pred_fallthru
        _
      // Predicated region
      $region21: #{rel_partial_mha_forward.11} parent=11 // pred_check
        %p191 = pneg %p142
      $region22: #{rel_partial_mha_forward.11} parent=11 // pred_check_branch
        %193 = sbr.rel (%p191) target = $region24
      $region23: #{rel_partial_mha_forward.11} parent=11 // pred_region
        _
      $region24: #{rel_partial_mha_forward.11} parent=11 // pred_fallthru
        _
    $region12: #{rel_partial_mha_forward.11} parent=5 // pred_fallthru
      _
    %p194 = scmp.lt.s32.totalorder %s11, 2
    // Predicated region
    $region25: #{rel_partial_mha_forward.11} parent=5 // pred_check
      %p195 = pneg %p194
    $region26: #{rel_partial_mha_forward.11} parent=5 // pred_check_branch
      %197 = sbr.rel (%p195) target = $region28
    $region27: #{rel_partial_mha_forward.11} parent=5 // pred_region
      // Predicated region
      $region29: #{rel_partial_mha_forward.11} parent=27 // pred_check
        %p198 = pneg %p45
      $region30: #{rel_partial_mha_forward.11} parent=27 // pred_check_branch
        %200 = sbr.rel (%p198) target = $region32
      $region31: #{rel_partial_mha_forward.11} parent=27 // pred_region
        %p201 = scmp.lt.s32.totalorder %s18, 1
        %s202 = scalar_select %p201, %s18, 1
        %p203 = scmp.lt.s32.totalorder %s19, 0
        %s204 = scalar_select %p203, %s19, 0
        %s205 = smul.addr %s202, 4
        %s206 = sadd.s32 %s204, %s205
        %s207 = smul.addr %s206, 4
        %s208 = scalar_lea.vmem %s0, %s207
      $region32: #{rel_partial_mha_forward.11} parent=27 // pred_fallthru
        _
      // Predicated region
      $region33: #{rel_partial_mha_forward.11} parent=27 // pred_check
        %p209 = pneg %p73
      $region34: #{rel_partial_mha_forward.11} parent=27 // pred_check_branch
        %211 = sbr.rel (%p209) target = $region36
      $region35: #{rel_partial_mha_forward.11} parent=27 // pred_region
        %p212 = scmp.lt.s32.totalorder %s18, 1
        %s213 = scalar_select %p212, %s18, 1
        %p214 = scmp.lt.s32.totalorder %s19, 0
        %s215 = scalar_select %p214, %s19, 0
        %s216 = sadd.s32 %s215, %s213
        %s217 = smul.addr %s216, 8
        %s218 = scalar_lea.vmem %s1, %s217
      $region36: #{rel_partial_mha_forward.11} parent=27 // pred_fallthru
        _
    $region28: #{rel_partial_mha_forward.11} parent=5 // pred_fallthru
      _
    %p219 = scmp.le.s32.totalorder 1, %s11
    %p220 = scmp.lt.s32.totalorder %s11, 3
    %p221 = pnand %p219, %p220
    %p222 = pneg %p221
    // Predicated region
    $region37: #{rel_partial_mha_forward.11} parent=5 // pred_check
      _
    $region38: #{rel_partial_mha_forward.11} parent=5 // pred_check_branch
      %224 = sbr.rel (%p221) target = $region40
    $region39: #{rel_partial_mha_forward.11} parent=5 // pred_region
      %s225 = ssub.s32 %s11, 1
      %p226 = scmp.lt.s32.totalorder %s20, 1
      %s227 = scalar_select %p226, %s20, 1
      %p228 = scmp.lt.s32.totalorder %s21, 0
      %s229 = scalar_select %p228, %s21, 0
      %s230 = smul.addr %s227, 4
      %s231 = sadd.s32 %s229, %s230
      %s232 = smul.addr %s231, 4
      %s233 = scalar_lea.vmem %s0, %s232
      %p234 = pneg %p51
      %p235 = pneg %p48
      %p236 = scmp.lt.s32.totalorder %s20, 1
      %s237 = scalar_select %p236, %s20, 1
      %p238 = scmp.lt.s32.totalorder %s21, 0
      %s239 = scalar_select %p238, %s21, 0
      %s240 = sadd.s32 %s239, %s237
      %s241 = smul.addr %s240, 8
      %s242 = scalar_lea.vmem %s1, %s241
      %p243 = pneg %p79
      %p244 = pneg %p76
      %p245 = pneg %p100
      %p246 = pneg %p97
      %p247 = pneg %p121
      %p248 = pneg %p118
      %p249 = pneg %p142
      %p250 = pneg %p139
      %p251 = pneg %p170
      %p252 = pneg %p167
      %p253 = scmp.lt.s32.totalorder %s20, 1
      %s254 = scalar_select %p253, %s20, 1
      %p255 = scmp.lt.s32.totalorder %s21, 0
      %s256 = scalar_select %p255, %s21, 0
      %s257 = sadd.s32 %s256, %s254
      %s258 = smul.addr %s257, 8
      %s259 = scalar_lea.vmem %s5, %s258
      %p260 = scmp.lt.s32.totalorder %s20, 1
      %s261 = scalar_select %p260, %s20, 1
      %p262 = scmp.lt.s32.totalorder %s21, 0
      %s263 = scalar_select %p262, %s21, 0
      %s264 = smul.addr %s261, 4
      %s265 = sadd.s32 %s263, %s264
      %s266 = smul.addr %s265, 4
      %s267 = scalar_lea.vmem %s0, %s266
      %p268 = scmp.lt.s32.totalorder %s20, 1
      %s269 = scalar_select %p268, %s20, 1
      %p270 = scmp.lt.s32.totalorder %s21, 0
      %s271 = scalar_select %p270, %s21, 0
      %s272 = sadd.s32 %s271, %s269
      %s273 = smul.addr %s272, 8
      %s274 = scalar_lea.vmem %s1, %s273
      %p275 = scmp.lt.s32.totalorder %s20, 1
      %s276 = scalar_select %p275, %s20, 1
      %p277 = scmp.lt.s32.totalorder %s21, 0
      %s278 = scalar_select %p277, %s21, 0
      %s279 = sadd.s32 %s278, %s276
      %s280 = smul.addr %s279, 8
      %s281 = scalar_lea.vmem %s5, %s280
      %v283 = vld [vmem:[%s267] sm:$0xf]
      %v284 = vld [vmem:[%s267 + $0x4] sm:$0xf]
      %v285 = vld [vmem:[%s267 + $0x8] sm:$0xf]
      %v286 = vld [vmem:[%s267 + $0xc] sm:$0xf]
      %v287 = vld [vmem:[%s2] sm:$0xf]
      %v288 = vld [vmem:[%s2 + $0x4] sm:$0xf]
      %v289 = vld [vmem:[%s2 + $0x8] sm:$0xf]
      %v290 = vld [vmem:[%s2 + $0xc] sm:$0xf]
      %vm291 = vcmask 64512
      %v293 = vsel %vm291, %v284, 0
      %vm295 = vcmask 1043456
      %v297 = vsel %vm295, %v288, 0
      %299 = vmatprep.subr.bf16.mxu0 0
      %300 = vmatpush1.bf16.msra.mxu0 0
      %301 = vmatprep.subr.bf16.mxu0 0
      %302 = vmatpush1.bf16.msra.mxu0 0
      %303 = vmatprep.subr.bf16.mxu0 0
      %304 = vmatpush1.bf16.msra.mxu0 0
      %305 = vmatprep.subr.bf16.mxu0 0
      %306 = vmatpush1.bf16.msra.mxu0 0
      %307 = vmatprep.subr.bf16.mxu0 0
      %308 = vmatpush1.bf16.msra.mxu0 0
      %309 = vmatprep.subr.bf16.mxu0 0
      %310 = vmatpush1.bf16.msra.mxu0 0
      %311 = vmatprep.subr.bf16.mxu0 0
      %312 = vmatpush1.bf16.msra.mxu0 0
      %313 = vmatprep.subr.bf16.mxu0 0
      %314 = vmatpush1.bf16.msra.mxu0 %v297
      %315 = vmatprep.subr.bf16.mxu0 0
      %316 = vmatpush2.bf16.msra.mxu0 0
      %317 = vmatprep.subr.bf16.mxu0 0
      %318 = vmatpush2.bf16.msra.mxu0 0
      %319 = vmatprep.subr.bf16.mxu0 0
      %320 = vmatpush2.bf16.msra.mxu0 0
      %321 = vmatprep.subr.bf16.mxu0 0
      %322 = vmatpush2.bf16.msra.mxu0 0
      %323 = vmatprep.subr.bf16.mxu0 0
      %324 = vmatpush2.bf16.msra.mxu0 0
      %325 = vmatprep.subr.bf16.mxu0 0
      %326 = vmatpush2.bf16.msra.mxu0 0
      %327 = vmatprep.subr.bf16.mxu0 0
      %328 = vmatpush2.bf16.msra.mxu0 0
      %329 = vmatprep.subr.bf16.mxu0 0
      %330 = vmatpush2.bf16.msra.mxu0 0
      %331 = vmatprep.mubr.bf16.mxu0 0
      %332 = vmatmul.mubr.bf16.gmra.mxu0 %v293
      %v333 = vpop.f32.mrf.mxu0
      %v334 = vadd.f32 0.0, %v333
      %v335 = vpop.f32.mrf.mxu0
      %v336 = vpop.f32.mrf.mxu0
      %v337 = vpop.f32.mrf.mxu0
      %338 = vdwg.mxu0
      %v340 = vsel %vm291, %v283, 0
      %v343 = vsel %vm295, %v287, 0
      %345 = vmatprep.subr.bf16.mxu0 0
      %346 = vmatpush1.bf16.msra.mxu0 0
      %347 = vmatprep.subr.bf16.mxu0 0
      %348 = vmatpush1.bf16.msra.mxu0 0
      %349 = vmatprep.subr.bf16.mxu0 0
      %350 = vmatpush1.bf16.msra.mxu0 0
      %351 = vmatprep.subr.bf16.mxu0 0
      %352 = vmatpush1.bf16.msra.mxu0 0
      %353 = vmatprep.subr.bf16.mxu0 0
      %354 = vmatpush1.bf16.msra.mxu0 0
      %355 = vmatprep.subr.bf16.mxu0 0
      %356 = vmatpush1.bf16.msra.mxu0 0
      %357 = vmatprep.subr.bf16.mxu0 0
      %358 = vmatpush1.bf16.msra.mxu0 0
      %359 = vmatprep.subr.bf16.mxu0 0
      %360 = vmatpush1.bf16.msra.mxu0 %v343
      %361 = vmatprep.subr.bf16.mxu0 0
      %362 = vmatpush2.bf16.msra.mxu0 0
      %363 = vmatprep.subr.bf16.mxu0 0
      %364 = vmatpush2.bf16.msra.mxu0 0
      %365 = vmatprep.subr.bf16.mxu0 0
      %366 = vmatpush2.bf16.msra.mxu0 0
      %367 = vmatprep.subr.bf16.mxu0 0
      %368 = vmatpush2.bf16.msra.mxu0 0
      %369 = vmatprep.subr.bf16.mxu0 0
      %370 = vmatpush2.bf16.msra.mxu0 0
      %371 = vmatprep.subr.bf16.mxu0 0
      %372 = vmatpush2.bf16.msra.mxu0 0
      %373 = vmatprep.subr.bf16.mxu0 0
      %374 = vmatpush2.bf16.msra.mxu0 0
      %375 = vmatprep.subr.bf16.mxu0 0
      %376 = vmatpush2.bf16.msra.mxu0 0
      %377 = vmatprep.mubr.bf16.mxu0 0
      %378 = vmatmul.mubr.bf16.gmra.mxu0 %v340
      %v379 = vpop.f32.mrf.mxu0
      %v380 = vadd.f32 %v334, %v379
      %v381 = vpop.f32.mrf.mxu0
      %v382 = vpop.f32.mrf.mxu0
      %v383 = vpop.f32.mrf.mxu0
      %384 = vdwg.mxu0
      %v386 = vsel %vm291, %v285, 0
      %v389 = vsel %vm295, %v289, 0
      %391 = vmatprep.subr.bf16.mxu0 0
      %392 = vmatpush1.bf16.msra.mxu0 0
      %393 = vmatprep.subr.bf16.mxu0 0
      %394 = vmatpush1.bf16.msra.mxu0 0
      %395 = vmatprep.subr.bf16.mxu0 0
      %396 = vmatpush1.bf16.msra.mxu0 0
      %397 = vmatprep.subr.bf16.mxu0 0
      %398 = vmatpush1.bf16.msra.mxu0 0
      %399 = vmatprep.subr.bf16.mxu0 0
      %400 = vmatpush1.bf16.msra.mxu0 0
      %401 = vmatprep.subr.bf16.mxu0 0
      %402 = vmatpush1.bf16.msra.mxu0 0
      %403 = vmatprep.subr.bf16.mxu0 0
      %404 = vmatpush1.bf16.msra.mxu0 0
      %405 = vmatprep.subr.bf16.mxu0 0
      %406 = vmatpush1.bf16.msra.mxu0 %v389
      %407 = vmatprep.subr.bf16.mxu0 0
      %408 = vmatpush2.bf16.msra.mxu0 0
      %409 = vmatprep.subr.bf16.mxu0 0
      %410 = vmatpush2.bf16.msra.mxu0 0
      %411 = vmatprep.subr.bf16.mxu0 0
      %412 = vmatpush2.bf16.msra.mxu0 0
      %413 = vmatprep.subr.bf16.mxu0 0
      %414 = vmatpush2.bf16.msra.mxu0 0
      %415 = vmatprep.subr.bf16.mxu0 0
      %416 = vmatpush2.bf16.msra.mxu0 0
      %417 = vmatprep.subr.bf16.mxu0 0
      %418 = vmatpush2.bf16.msra.mxu0 0
      %419 = vmatprep.subr.bf16.mxu0 0
      %420 = vmatpush2.bf16.msra.mxu0 0
      %421 = vmatprep.subr.bf16.mxu0 0
      %422 = vmatpush2.bf16.msra.mxu0 0
      %423 = vmatprep.mubr.bf16.mxu0 0
      %424 = vmatmul.mubr.bf16.gmra.mxu0 %v386
      %v425 = vpop.f32.mrf.mxu0
      %v426 = vadd.f32 0.0, %v425
      %v427 = vpop.f32.mrf.mxu0
      %v428 = vpop.f32.mrf.mxu0
      %v429 = vpop.f32.mrf.mxu0
      %430 = vdwg.mxu0
      %v431 = vadd.f32 %v380, %v426
      %v433 = vsel %vm291, %v286, 0
      %v436 = vsel %vm295, %v290, 0
      %438 = vmatprep.subr.bf16.mxu0 0
      %439 = vmatpush1.bf16.msra.mxu0 0
      %440 = vmatprep.subr.bf16.mxu0 0
      %441 = vmatpush1.bf16.msra.mxu0 0
      %442 = vmatprep.subr.bf16.mxu0 0
      %443 = vmatpush1.bf16.msra.mxu0 0
      %444 = vmatprep.subr.bf16.mxu0 0
      %445 = vmatpush1.bf16.msra.mxu0 0
      %446 = vmatprep.subr.bf16.mxu0 0
      %447 = vmatpush1.bf16.msra.mxu0 0
      %448 = vmatprep.subr.bf16.mxu0 0
      %449 = vmatpush1.bf16.msra.mxu0 0
      %450 = vmatprep.subr.bf16.mxu0 0
      %451 = vmatpush1.bf16.msra.mxu0 0
      %452 = vmatprep.subr.bf16.mxu0 0
      %453 = vmatpush1.bf16.msra.mxu0 %v436
      %454 = vmatprep.subr.bf16.mxu0 0
      %455 = vmatpush2.bf16.msra.mxu0 0
      %456 = vmatprep.subr.bf16.mxu0 0
      %457 = vmatpush2.bf16.msra.mxu0 0
      %458 = vmatprep.subr.bf16.mxu0 0
      %459 = vmatpush2.bf16.msra.mxu0 0
      %460 = vmatprep.subr.bf16.mxu0 0
      %461 = vmatpush2.bf16.msra.mxu0 0
      %462 = vmatprep.subr.bf16.mxu0 0
      %463 = vmatpush2.bf16.msra.mxu0 0
      %464 = vmatprep.subr.bf16.mxu0 0
      %465 = vmatpush2.bf16.msra.mxu0 0
      %466 = vmatprep.subr.bf16.mxu0 0
      %467 = vmatpush2.bf16.msra.mxu0 0
      %468 = vmatprep.subr.bf16.mxu0 0
      %469 = vmatpush2.bf16.msra.mxu0 0
      %470 = vmatprep.mubr.bf16.mxu0 0
      %471 = vmatmul.mubr.bf16.gmra.mxu0 %v433
      %v472 = vpop.f32.mrf.mxu0
      %v473 = vadd.f32 0.0, %v472
      %v474 = vpop.f32.mrf.mxu0
      %v475 = vpop.f32.mrf.mxu0
      %v476 = vpop.f32.mrf.mxu0
      %477 = vdwg.mxu0
      %v478 = vadd.f32 %v431, %v473
      %v479 = vld [vmem:[%s274] sm:$0xff]
      %v480 = vadd.f32 %v479, %v478
      %vm481 = vcmask 261120
      %v482 = vsel %vm481, %v480, 0.0
      %483 = vadd.xlane.f32.xlu0 %v482
      %v484 = vpop.xlane.xlu0 %483
      %v485 = vrcp.pop 32.0
      %v486 = vmul.f32 %v484, %v485
      %v487 = vsub.f32 %v480, %v486
      %v488 = vmul.f32 %v487, %v487
      %v489 = vsel %vm481, %v488, 0.0
      %490 = vadd.xlane.f32.xlu0 %v489
      %v491 = vpop.xlane.xlu0 %490
      %v492 = vmul.f32 %v491, %v485
      %v493 = vadd.f32 %v492, 1e-05
      %v494 = vrsqrt.pop %v493
      %v495 = vmul.f32 %v487, %v494
      %v496 = vld [vmem:[%s3] sm:$0x1]
      %v498 = vlaneseq
      %v499 = vshrl.u32 %v498, 7
      %v500 = vsub.s32 0, %v499
      %v501 = vrot.slane %v496, %v500
      %v503 = vmul.f32 %v495, %v501
      %v504 = vld [vmem:[%s4] sm:$0x1]
      %v506 = vlaneseq
      %v507 = vshrl.u32 %v506, 7
      %v508 = vsub.s32 0, %v507
      %v509 = vrot.slane %v504, %v508
      %v511 = vadd.f32 %v503, %v509
      %512 = vst.msk [vmem:[%s281] sm:$0xff] %vm481, %v511
      %p513 = scmp.lt.s32.totalorder %s20, 1
      %s514 = scalar_select %p513, %s20, 1
      %p515 = scmp.lt.s32.totalorder %s21, 0
      %s516 = scalar_select %p515, %s21, 0
      %s517 = sadd.s32 %s516, %s514
      %s518 = smul.addr %s517, 8
      %s519 = scalar_lea.vmem %s5, %s518
      // Predicated region
      $region41: #{rel_partial_mha_forward.11} parent=39 // pred_check
        %p520 = pneg %p167
      $region42: #{rel_partial_mha_forward.11} parent=39 // pred_check_branch
        %522 = sbr.rel (%p520) target = $region44
      $region43: #{rel_partial_mha_forward.11} parent=39 // pred_region
        _
      $region44: #{rel_partial_mha_forward.11} parent=39 // pred_fallthru
        _
    $region40: #{rel_partial_mha_forward.11} parent=5 // pred_fallthru
      _
    %p523 = scmp.le.s32.totalorder 2, %s11
    // Predicated region
    $region45: #{rel_partial_mha_forward.11} parent=5 // pred_check
      %p524 = pneg %p523
    $region46: #{rel_partial_mha_forward.11} parent=5 // pred_check_branch
      %526 = sbr.rel (%p524) target = $region48
    $region47: #{rel_partial_mha_forward.11} parent=5 // pred_region
      %s527 = ssub.s32 %s11, 2
      // Predicated region
      $region49: #{rel_partial_mha_forward.11} parent=47 // pred_check
        %p528 = pneg %p173
      $region50: #{rel_partial_mha_forward.11} parent=47 // pred_check_branch
        %530 = sbr.rel (%p528) target = $region52
      $region51: #{rel_partial_mha_forward.11} parent=47 // pred_region
        %p531 = scmp.lt.s32.totalorder %s22, 1
        %s532 = scalar_select %p531, %s22, 1
        %p533 = scmp.lt.s32.totalorder %s23, 0
        %s534 = scalar_select %p533, %s23, 0
        %s535 = sadd.s32 %s534, %s532
        %s536 = smul.addr %s535, 8
        %s537 = scalar_lea.vmem %s5, %s536
      $region52: #{rel_partial_mha_forward.11} parent=47 // pred_fallthru
        _
    $region48: #{rel_partial_mha_forward.11} parent=5 // pred_fallthru
      _
  $region6: #{rel_partial_mha_forward.11} parent=0 // loop_footer
    %s15 = sadd.s32 1, %s11
  $region7: #{rel_partial_mha_forward.11} parent=0 // loop_footer_branch
    %10 = sbr.rel target = $region3
  $region8: #{rel_partial_mha_forward.11} parent=0 // loop_exit
    _

// kernel: rel_partial_mha_forward.10
$region0: #{rel_partial_mha_forward.10}
  #allocation0 [shape = 'u32[]', space=smem, size = 0x4, offset = 0x4, fixed_abs, tag = 'smem constant byte address 0x4 - core index']
  #allocation1 [shape = 'u32[144,128]{1,0:T(1,128)}', space=vmem, size = 0x12000, scoped, tag = 'internal scratch']
  %s0 = inlined_call_operand.vmem [shape: bf16[2,4,8,8], index: 0, kind: input, shape index: {}]
  %s1 = inlined_call_operand.vmem [shape: bf16[2,4,8,8], index: 1, kind: input, shape index: {}]
  %s2 = inlined_call_operand.vmem [shape: bf16[2,4,8,8], index: 2, kind: input, shape index: {}]
  %s3 = inlined_call_operand.vmem [shape: bf16[4,8,8], index: 3, kind: input, shape index: {}]
  %s4 = inlined_call_operand.vmem [shape: bf16[4,1,8], index: 4, kind: input, shape index: {}]
  %s5 = inlined_call_operand.vmem [shape: bf16[4,1,8], index: 5, kind: input, shape index: {}]
  %s6 = inlined_call_operand.vmem [shape: bf16[2,4,8,8], index: 6, kind: output, shape index: {}]
  %s7 = sld [smem:[#allocation0]]
  $region57: #{rel_partial_mha_forward.10} parent=0
    _
  %s9 = ssub.s32 1, %s7
  %s10 = scalar_select 0, %s9, %s7
  loop: start=0, step=1, limit=4
  $region2: #{rel_partial_mha_forward.10} parent=0 // loop_pre_header
    _
  $region3: #{rel_partial_mha_forward.10} parent=0 // loop_header
    %s12 = sphi 0, %s16
    %p13 = scmp.ge.s32.totalorder %s12, 4
    %s19 = sphi 0, %s31
    %s20 = sphi 0, %s27
    %s21 = sphi 0, %s19
    %s22 = sphi 0, %s20
    %s23 = sphi 0, %s21
    %s24 = sphi 0, %s22
    %s36 = sphi 0, %s38
    %s39 = sphi 0, %s36
    %s40 = sphi 0, %s39
    %s56 = sphi 0, %s40
    %s62 = sphi 0, %s64
    %s65 = sphi 0, %s62
    %s66 = sphi 0, %s65
    %s82 = sphi 0, %s66
    %s88 = sphi 0, %s90
    %s91 = sphi 0, %s88
    %s92 = sphi 0, %s91
    %s108 = sphi 0, %s92
    %s112 = sphi 0, %s112
    %s114 = sphi 0, %s112
    %s115 = sphi 0, %s114
    %s129 = sphi 0, %s115
    %s133 = sphi 0, %s133
    %s135 = sphi 0, %s133
    %s136 = sphi 0, %s135
    %s150 = sphi 0, %s136
    %s154 = sphi 0, %s154
    %s156 = sphi 0, %s154
    %s157 = sphi 0, %s156
    %s171 = sphi 0, %s157
    %s179 = sphi 0, %s181
    %s182 = sphi 0, %s179
    %s183 = sphi 0, %s182
    %s199 = sphi 0, %s183
  $region4: #{rel_partial_mha_forward.10} parent=0 // loop_header_branch
    %15 = sbr.rel (%p13) target = $region8
  $region5: #{rel_partial_mha_forward.10} parent=0 // loop_body
    %s17 = ssub.s32 %s12, 1
    %s18 = ssub.s32 %s12, 2
    %s25 = sadd.s32 1, %s20
    %p26 = scmp.ge.s32.totalorder %s25, 1
    %s27 = scalar_select %p26, 0, %s25
    %s28 = sadd.s32 1, %s19
    %s29 = scalar_select %p26, %s28, %s19
    %p30 = scmp.ge.s32.totalorder %s29, 2
    %s31 = scalar_select %p30, 0, %s29
    %s32 = ssub.s32 %s19, %s31
    %s33 = ssub.s32 %s20, %s27
    %s34 = sor.u32 %s32, %s33
    %p35 = scmp.eq.s32.totalorder %s34, 0
    %s37 = sadd.s32 %s36, 1
    %s38 = scalar_select %p35, %s36, %s37
    %p41 = pneg %p35
    %p42 = scmp.eq.s32.totalorder %s12, 1
    %p43 = por %p41, %p42
    %p44 = scmp.ne.s32.totalorder %s36, %s39
    %p45 = scmp.eq.s32.totalorder %s12, 0
    %p46 = por %p44, %p45
    %p47 = scmp.ne.s32.totalorder %s36, %s39
    %p48 = scmp.eq.s32.totalorder %s17, 1
    %p49 = por %p47, %p48
    %p50 = scmp.ne.s32.totalorder %s39, %s40
    %p51 = scmp.eq.s32.totalorder %s17, 0
    %p52 = por %p50, %p51
    %p53 = scmp.ne.s32.totalorder %s39, %s40
    %p54 = scmp.eq.s32.totalorder %s18, 1
    %p55 = por %p53, %p54
    %p57 = scmp.ne.s32.totalorder %s40, %s56
    %p58 = scmp.eq.s32.totalorder %s18, 0
    %p59 = por %p57, %p58
    %s60 = ssub.s32 %s19, %s31
    %p61 = scmp.eq.s32.totalorder %s60, 0
    %s63 = sadd.s32 %s62, 1
    %s64 = scalar_select %p61, %s62, %s63
    %p67 = pneg %p61
    %p68 = scmp.eq.s32.totalorder %s12, 1
    %p69 = por %p67, %p68
    %p70 = scmp.ne.s32.totalorder %s62, %s65
    %p71 = scmp.eq.s32.totalorder %s12, 0
    %p72 = por %p70, %p71
    %p73 = scmp.ne.s32.totalorder %s62, %s65
    %p74 = scmp.eq.s32.totalorder %s17, 1
    %p75 = por %p73, %p74
    %p76 = scmp.ne.s32.totalorder %s65, %s66
    %p77 = scmp.eq.s32.totalorder %s17, 0
    %p78 = por %p76, %p77
    %p79 = scmp.ne.s32.totalorder %s65, %s66
    %p80 = scmp.eq.s32.totalorder %s18, 1
    %p81 = por %p79, %p80
    %p83 = scmp.ne.s32.totalorder %s66, %s82
    %p84 = scmp.eq.s32.totalorder %s18, 0
    %p85 = por %p83, %p84
    %s86 = ssub.s32 %s19, %s31
    %p87 = scmp.eq.s32.totalorder %s86, 0
    %s89 = sadd.s32 %s88, 1
    %s90 = scalar_select %p87, %s88, %s89
    %p93 = pneg %p87
    %p94 = scmp.eq.s32.totalorder %s12, 1
    %p95 = por %p93, %p94
    %p96 = scmp.ne.s32.totalorder %s88, %s91
    %p97 = scmp.eq.s32.totalorder %s12, 0
    %p98 = por %p96, %p97
    %p99 = scmp.ne.s32.totalorder %s88, %s91
    %p100 = scmp.eq.s32.totalorder %s17, 1
    %p101 = por %p99, %p100
    %p102 = scmp.ne.s32.totalorder %s91, %s92
    %p103 = scmp.eq.s32.totalorder %s17, 0
    %p104 = por %p102, %p103
    %p105 = scmp.ne.s32.totalorder %s91, %s92
    %p106 = scmp.eq.s32.totalorder %s18, 1
    %p107 = por %p105, %p106
    %p109 = scmp.ne.s32.totalorder %s92, %s108
    %p110 = scmp.eq.s32.totalorder %s18, 0
    %p111 = por %p109, %p110
    %s113 = sadd.s32 %s112, 1
    %p116 = scmp.eq.s32.totalorder %s12, 1
    %p117 = scmp.ne.s32.totalorder %s112, %s114
    %p118 = scmp.eq.s32.totalorder %s12, 0
    %p119 = por %p117, %p118
    %p120 = scmp.ne.s32.totalorder %s112, %s114
    %p121 = scmp.eq.s32.totalorder %s17, 1
    %p122 = por %p120, %p121
    %p123 = scmp.ne.s32.totalorder %s114, %s115
    %p124 = scmp.eq.s32.totalorder %s17, 0
    %p125 = por %p123, %p124
    %p126 = scmp.ne.s32.totalorder %s114, %s115
    %p127 = scmp.eq.s32.totalorder %s18, 1
    %p128 = por %p126, %p127
    %p130 = scmp.ne.s32.totalorder %s115, %s129
    %p131 = scmp.eq.s32.totalorder %s18, 0
    %p132 = por %p130, %p131
    %s134 = sadd.s32 %s133, 1
    %p137 = scmp.eq.s32.totalorder %s12, 1
    %p138 = scmp.ne.s32.totalorder %s133, %s135
    %p139 = scmp.eq.s32.totalorder %s12, 0
    %p140 = por %p138, %p139
    %p141 = scmp.ne.s32.totalorder %s133, %s135
    %p142 = scmp.eq.s32.totalorder %s17, 1
    %p143 = por %p141, %p142
    %p144 = scmp.ne.s32.totalorder %s135, %s136
    %p145 = scmp.eq.s32.totalorder %s17, 0
    %p146 = por %p144, %p145
    %p147 = scmp.ne.s32.totalorder %s135, %s136
    %p148 = scmp.eq.s32.totalorder %s18, 1
    %p149 = por %p147, %p148
    %p151 = scmp.ne.s32.totalorder %s136, %s150
    %p152 = scmp.eq.s32.totalorder %s18, 0
    %p153 = por %p151, %p152
    %s155 = sadd.s32 %s154, 1
    %p158 = scmp.eq.s32.totalorder %s12, 1
    %p159 = scmp.ne.s32.totalorder %s154, %s156
    %p160 = scmp.eq.s32.totalorder %s12, 0
    %p161 = por %p159, %p160
    %p162 = scmp.ne.s32.totalorder %s154, %s156
    %p163 = scmp.eq.s32.totalorder %s17, 1
    %p164 = por %p162, %p163
    %p165 = scmp.ne.s32.totalorder %s156, %s157
    %p166 = scmp.eq.s32.totalorder %s17, 0
    %p167 = por %p165, %p166
    %p168 = scmp.ne.s32.totalorder %s156, %s157
    %p169 = scmp.eq.s32.totalorder %s18, 1
    %p170 = por %p168, %p169
    %p172 = scmp.ne.s32.totalorder %s157, %s171
    %p173 = scmp.eq.s32.totalorder %s18, 0
    %p174 = por %p172, %p173
    %s175 = ssub.s32 %s19, %s31
    %s176 = ssub.s32 %s20, %s27
    %s177 = sor.u32 %s175, %s176
    %p178 = scmp.eq.s32.totalorder %s177, 0
    %s180 = sadd.s32 %s179, 1
    %s181 = scalar_select %p178, %s179, %s180
    %p184 = pneg %p178
    %p185 = scmp.eq.s32.totalorder %s12, 1
    %p186 = por %p184, %p185
    %p187 = scmp.ne.s32.totalorder %s179, %s182
    %p188 = scmp.eq.s32.totalorder %s12, 0
    %p189 = por %p187, %p188
    %p190 = scmp.ne.s32.totalorder %s179, %s182
    %p191 = scmp.eq.s32.totalorder %s17, 1
    %p192 = por %p190, %p191
    %p193 = scmp.ne.s32.totalorder %s182, %s183
    %p194 = scmp.eq.s32.totalorder %s17, 0
    %p195 = por %p193, %p194
    %p196 = scmp.ne.s32.totalorder %s182, %s183
    %p197 = scmp.eq.s32.totalorder %s18, 1
    %p198 = por %p196, %p197
    %p200 = scmp.ne.s32.totalorder %s183, %s199
    %p201 = scmp.eq.s32.totalorder %s18, 0
    %p202 = por %p200, %p201
    %p203 = scmp.le.s32.totalorder 1, %s12
    %p204 = scmp.lt.s32.totalorder %s12, 3
    %p205 = pnand %p203, %p204
    %p206 = pneg %p205
    // Predicated region
    $region9: #{rel_partial_mha_forward.10} parent=5 // pred_check
      _
    $region10: #{rel_partial_mha_forward.10} parent=5 // pred_check_branch
      %208 = sbr.rel (%p205) target = $region12
    $region11: #{rel_partial_mha_forward.10} parent=5 // pred_region
      %s209 = ssub.s32 %s12, 1
      // Predicated region
      $region13: #{rel_partial_mha_forward.10} parent=11 // pred_check
        %p210 = pneg %p125
      $region14: #{rel_partial_mha_forward.10} parent=11 // pred_check_branch
        %212 = sbr.rel (%p210) target = $region16
      $region15: #{rel_partial_mha_forward.10} parent=11 // pred_region
        _
      $region16: #{rel_partial_mha_forward.10} parent=11 // pred_fallthru
        _
      // Predicated region
      $region17: #{rel_partial_mha_forward.10} parent=11 // pred_check
        %p213 = pneg %p146
      $region18: #{rel_partial_mha_forward.10} parent=11 // pred_check_branch
        %215 = sbr.rel (%p213) target = $region20
      $region19: #{rel_partial_mha_forward.10} parent=11 // pred_region
        _
      $region20: #{rel_partial_mha_forward.10} parent=11 // pred_fallthru
        _
      // Predicated region
      $region21: #{rel_partial_mha_forward.10} parent=11 // pred_check
        %p216 = pneg %p167
      $region22: #{rel_partial_mha_forward.10} parent=11 // pred_check_branch
        %218 = sbr.rel (%p216) target = $region24
      $region23: #{rel_partial_mha_forward.10} parent=11 // pred_region
        _
      $region24: #{rel_partial_mha_forward.10} parent=11 // pred_fallthru
        _
    $region12: #{rel_partial_mha_forward.10} parent=5 // pred_fallthru
      _
    %p219 = scmp.lt.s32.totalorder %s12, 2
    // Predicated region
    $region25: #{rel_partial_mha_forward.10} parent=5 // pred_check
      %p220 = pneg %p219
    $region26: #{rel_partial_mha_forward.10} parent=5 // pred_check_branch
      %222 = sbr.rel (%p220) target = $region28
    $region27: #{rel_partial_mha_forward.10} parent=5 // pred_region
      // Predicated region
      $region29: #{rel_partial_mha_forward.10} parent=27 // pred_check
        %p223 = pneg %p46
      $region30: #{rel_partial_mha_forward.10} parent=27 // pred_check_branch
        %225 = sbr.rel (%p223) target = $region32
      $region31: #{rel_partial_mha_forward.10} parent=27 // pred_region
        %p226 = scmp.lt.s32.totalorder %s19, 1
        %s227 = scalar_select %p226, %s19, 1
        %p228 = scmp.lt.s32.totalorder %s20, 0
        %s229 = scalar_select %p228, %s20, 0
        %s230 = smul.addr %s227, 4
        %s231 = sadd.s32 %s229, %s230
        %s232 = smul.addr %s231, 4
        %s233 = scalar_lea.vmem %s0, %s232
      $region32: #{rel_partial_mha_forward.10} parent=27 // pred_fallthru
        _
      // Predicated region
      $region33: #{rel_partial_mha_forward.10} parent=27 // pred_check
        %p234 = pneg %p72
      $region34: #{rel_partial_mha_forward.10} parent=27 // pred_check_branch
        %236 = sbr.rel (%p234) target = $region36
      $region35: #{rel_partial_mha_forward.10} parent=27 // pred_region
        %p237 = scmp.lt.s32.totalorder %s19, 1
        %s238 = scalar_select %p237, %s19, 1
        %s239 = smul.addr %s238, 4
        %s240 = smul.addr %s239, 4
        %s241 = scalar_lea.vmem %s1, %s240
      $region36: #{rel_partial_mha_forward.10} parent=27 // pred_fallthru
        _
      // Predicated region
      $region37: #{rel_partial_mha_forward.10} parent=27 // pred_check
        %p242 = pneg %p98
      $region38: #{rel_partial_mha_forward.10} parent=27 // pred_check_branch
        %244 = sbr.rel (%p242) target = $region40
      $region39: #{rel_partial_mha_forward.10} parent=27 // pred_region
        %p245 = scmp.lt.s32.totalorder %s19, 1
        %s246 = scalar_select %p245, %s19, 1
        %s247 = smul.addr %s246, 4
        %s248 = smul.addr %s247, 4
        %s249 = scalar_lea.vmem %s2, %s248
      $region40: #{rel_partial_mha_forward.10} parent=27 // pred_fallthru
        _
    $region28: #{rel_partial_mha_forward.10} parent=5 // pred_fallthru
      _
    %p250 = scmp.le.s32.totalorder 1, %s12
    %p251 = scmp.lt.s32.totalorder %s12, 3
    %p252 = pnand %p250, %p251
    %p253 = pneg %p252
    // Predicated region
    $region41: #{rel_partial_mha_forward.10} parent=5 // pred_check
      _
    $region42: #{rel_partial_mha_forward.10} parent=5 // pred_check_branch
      %255 = sbr.rel (%p252) target = $region44
    $region43: #{rel_partial_mha_forward.10} parent=5 // pred_region
      %s256 = ssub.s32 %s12, 1
      %p257 = scmp.lt.s32.totalorder %s21, 1
      %s258 = scalar_select %p257, %s21, 1
      %p259 = scmp.lt.s32.totalorder %s22, 0
      %s260 = scalar_select %p259, %s22, 0
      %s261 = smul.addr %s258, 4
      %s262 = sadd.s32 %s260, %s261
      %s263 = smul.addr %s262, 4
      %s264 = scalar_lea.vmem %s0, %s263
      %p265 = pneg %p52
      %p266 = pneg %p49
      %p267 = scmp.lt.s32.totalorder %s21, 1
      %s268 = scalar_select %p267, %s21, 1
      %s269 = smul.addr %s268, 4
      %s270 = smul.addr %s269, 4
      %s271 = scalar_lea.vmem %s1, %s270
      %p272 = pneg %p78
      %p273 = pneg %p75
      %p274 = scmp.lt.s32.totalorder %s21, 1
      %s275 = scalar_select %p274, %s21, 1
      %s276 = smul.addr %s275, 4
      %s277 = smul.addr %s276, 4
      %s278 = scalar_lea.vmem %s2, %s277
      %p279 = pneg %p104
      %p280 = pneg %p101
      %p281 = pneg %p125
      %p282 = pneg %p122
      %p283 = pneg %p146
      %p284 = pneg %p143
      %p285 = pneg %p167
      %p286 = pneg %p164
      %p287 = pneg %p195
      %p288 = pneg %p192
      %p289 = scmp.lt.s32.totalorder %s21, 1
      %s290 = scalar_select %p289, %s21, 1
      %p291 = scmp.lt.s32.totalorder %s22, 0
      %s292 = scalar_select %p291, %s22, 0
      %s293 = smul.addr %s290, 4
      %s294 = sadd.s32 %s292, %s293
      %s295 = smul.addr %s294, 4
      %s296 = scalar_lea.vmem %s6, %s295
      %p297 = scmp.lt.s32.totalorder %s21, 1
      %s298 = scalar_select %p297, %s21, 1
      %p299 = scmp.lt.s32.totalorder %s22, 0
      %s300 = scalar_select %p299, %s22, 0
      %s301 = smul.addr %s298, 4
      %s302 = sadd.s32 %s300, %s301
      %s303 = smul.addr %s302, 4
      %s304 = scalar_lea.vmem %s0, %s303
      %p305 = scmp.lt.s32.totalorder %s21, 1
      %s306 = scalar_select %p305, %s21, 1
      %s307 = smul.addr %s306, 4
      %s308 = smul.addr %s307, 4
      %s309 = scalar_lea.vmem %s1, %s308
      %p310 = scmp.lt.s32.totalorder %s21, 1
      %s311 = scalar_select %p310, %s21, 1
      %s312 = smul.addr %s311, 4
      %s313 = smul.addr %s312, 4
      %s314 = scalar_lea.vmem %s2, %s313
      %p315 = scmp.lt.s32.totalorder %s21, 1
      %s316 = scalar_select %p315, %s21, 1
      %p317 = scmp.lt.s32.totalorder %s22, 0
      %s318 = scalar_select %p317, %s22, 0
      %s319 = smul.addr %s316, 4
      %s320 = sadd.s32 %s318, %s319
      %s321 = smul.addr %s320, 4
      %s322 = scalar_lea.vmem %s6, %s321
      %v324 = vld [vmem:[%s304] sm:$0xf]
      %v325 = vld [vmem:[%s304 + $0x4] sm:$0xf]
      %v326 = vld [vmem:[%s304 + $0x8] sm:$0xf]
      %v327 = vld [vmem:[%s304 + $0xc] sm:$0xf]
      %v328 = vld [vmem:[%s309] sm:$0xf]
      %v329 = vld [vmem:[%s309 + $0x4] sm:$0xf]
      %v330 = vld [vmem:[%s309 + $0x8] sm:$0xf]
      %v331 = vld [vmem:[%s309 + $0xc] sm:$0xf]
      %v332 = vld [vmem:[%s314] sm:$0xf]
      %v333 = vld [vmem:[%s314 + $0x4] sm:$0xf]
      %v334 = vld [vmem:[%s314 + $0x8] sm:$0xf]
      %v335 = vld [vmem:[%s314 + $0xc] sm:$0xf]
      %v336 = vld [vmem:[%s3] sm:$0xf]
      %v337 = vld [vmem:[%s3 + $0x4] sm:$0xf]
      %v338 = vld [vmem:[%s3 + $0x8] sm:$0xf]
      %v339 = vld [vmem:[%s3 + $0xc] sm:$0xf]
      %v340 = vld [vmem:[%s4] sm:$0x1]
      %v341 = vld [vmem:[%s4 + $0x1] sm:$0x1]
      %v342 = vld [vmem:[%s4 + $0x2] sm:$0x1]
      %v343 = vld [vmem:[%s4 + $0x3] sm:$0x1]
      %v344 = vld [vmem:[%s5] sm:$0x1]
      %v345 = vld [vmem:[%s5 + $0x1] sm:$0x1]
      %v346 = vld [vmem:[%s5 + $0x2] sm:$0x1]
      %v347 = vld [vmem:[%s5 + $0x3] sm:$0x1]
      %v349 = vpack.i.b16 %v340, %v340
      %v351 = vlaneseq
      %v352 = vshrl.u32 %v351, 7
      %v353 = vsub.s32 0, %v352
      %v354 = vrot.slane %v349, %v353
      %v356 = vpack.i.b16 %v341, %v341
      %v358 = vlaneseq
      %v359 = vshrl.u32 %v358, 7
      %v360 = vsub.s32 0, %v359
      %v361 = vrot.slane %v356, %v360
      %v363 = vpack.i.b16 %v342, %v342
      %v365 = vlaneseq
      %v366 = vshrl.u32 %v365, 7
      %v367 = vsub.s32 0, %v366
      %v368 = vrot.slane %v363, %v367
      %v370 = vpack.i.b16 %v343, %v343
      %v372 = vlaneseq
      %v373 = vshrl.u32 %v372, 7
      %v374 = vsub.s32 0, %v373
      %v375 = vrot.slane %v370, %v374
      %v376 = vadd.bf16 %v324, %v354
      %v377 = vadd.bf16 %v325, %v361
      %v378 = vadd.bf16 %v326, %v368
      %v379 = vadd.bf16 %v327, %v375
      %v381 = vpack.i.b16 %v344, %v344
      %v383 = vlaneseq
      %v384 = vshrl.u32 %v383, 7
      %v385 = vsub.s32 0, %v384
      %v386 = vrot.slane %v381, %v385
      %v388 = vpack.i.b16 %v345, %v345
      %v390 = vlaneseq
      %v391 = vshrl.u32 %v390, 7
      %v392 = vsub.s32 0, %v391
      %v393 = vrot.slane %v388, %v392
      %v395 = vpack.i.b16 %v346, %v346
      %v397 = vlaneseq
      %v398 = vshrl.u32 %v397, 7
      %v399 = vsub.s32 0, %v398
      %v400 = vrot.slane %v395, %v399
      %v402 = vpack.i.b16 %v347, %v347
      %v404 = vlaneseq
      %v405 = vshrl.u32 %v404, 7
      %v406 = vsub.s32 0, %v405
      %v407 = vrot.slane %v402, %v406
      %v408 = vadd.bf16 %v324, %v386
      %v409 = vadd.bf16 %v325, %v393
      %v410 = vadd.bf16 %v326, %v400
      %v411 = vadd.bf16 %v327, %v407
      %vm412 = vcmask 64512
      %v414 = vsel %vm412, %v408, 0
      %v417 = vsel %vm412, %v336, 0
      %419 = vmatprep.subr.bf16.mxu0 0
      %420 = vmatpush1.bf16.xpose.msra.mxu0 0
      %421 = vmatprep.subr.bf16.mxu0 0
      %422 = vmatpush1.bf16.xpose.msra.mxu0 0
      %423 = vmatprep.subr.bf16.mxu0 0
      %424 = vmatpush1.bf16.xpose.msra.mxu0 0
      %425 = vmatprep.subr.bf16.mxu0 0
      %426 = vmatpush1.bf16.xpose.msra.mxu0 0
      %427 = vmatprep.subr.bf16.mxu0 0
      %428 = vmatpush1.bf16.xpose.msra.mxu0 0
      %429 = vmatprep.subr.bf16.mxu0 0
      %430 = vmatpush1.bf16.xpose.msra.mxu0 0
      %431 = vmatprep.subr.bf16.mxu0 0
      %432 = vmatpush1.bf16.xpose.msra.mxu0 0
      %433 = vmatprep.subr.bf16.mxu0 0
      %434 = vmatpush1.bf16.xpose.msra.mxu0 %v417
      %435 = vmatprep.subr.bf16.mxu0 0
      %436 = vmatpush2.bf16.xpose.msra.mxu0 0
      %437 = vmatprep.subr.bf16.mxu0 0
      %438 = vmatpush2.bf16.xpose.msra.mxu0 0
      %439 = vmatprep.subr.bf16.mxu0 0
      %440 = vmatpush2.bf16.xpose.msra.mxu0 0
      %441 = vmatprep.subr.bf16.mxu0 0
      %442 = vmatpush2.bf16.xpose.msra.mxu0 0
      %443 = vmatprep.subr.bf16.mxu0 0
      %444 = vmatpush2.bf16.xpose.msra.mxu0 0
      %445 = vmatprep.subr.bf16.mxu0 0
      %446 = vmatpush2.bf16.xpose.msra.mxu0 0
      %447 = vmatprep.subr.bf16.mxu0 0
      %448 = vmatpush2.bf16.xpose.msra.mxu0 0
      %449 = vmatprep.subr.bf16.mxu0 0
      %450 = vmatpush2.bf16.xpose.msra.mxu0 0
      %451 = vmatprep.mubr.bf16.mxu0 0
      %452 = vmatmul.mubr.bf16.gmra.mxu0 %v414
      %v453 = vpop.f32.mrf.mxu0
      %v454 = vadd.f32 0.0, %v453
      %v455 = vpop.f32.mrf.mxu0
      %v456 = vpop.f32.mrf.mxu0
      %v457 = vpop.f32.mrf.mxu0
      %458 = vdwg.mxu0
      %v460 = vsel %vm412, %v409, 0
      %v463 = vsel %vm412, %v337, 0
      %465 = vmatprep.subr.bf16.mxu0 0
      %466 = vmatpush1.bf16.xpose.msra.mxu0 0
      %467 = vmatprep.subr.bf16.mxu0 0
      %468 = vmatpush1.bf16.xpose.msra.mxu0 0
      %469 = vmatprep.subr.bf16.mxu0 0
      %470 = vmatpush1.bf16.xpose.msra.mxu0 0
      %471 = vmatprep.subr.bf16.mxu0 0
      %472 = vmatpush1.bf16.xpose.msra.mxu0 0
      %473 = vmatprep.subr.bf16.mxu0 0
      %474 = vmatpush1.bf16.xpose.msra.mxu0 0
      %475 = vmatprep.subr.bf16.mxu0 0
      %476 = vmatpush1.bf16.xpose.msra.mxu0 0
      %477 = vmatprep.subr.bf16.mxu0 0
      %478 = vmatpush1.bf16.xpose.msra.mxu0 0
      %479 = vmatprep.subr.bf16.mxu0 0
      %480 = vmatpush1.bf16.xpose.msra.mxu0 %v463
      %481 = vmatprep.subr.bf16.mxu0 0
      %482 = vmatpush2.bf16.xpose.msra.mxu0 0
      %483 = vmatprep.subr.bf16.mxu0 0
      %484 = vmatpush2.bf16.xpose.msra.mxu0 0
      %485 = vmatprep.subr.bf16.mxu0 0
      %486 = vmatpush2.bf16.xpose.msra.mxu0 0
      %487 = vmatprep.subr.bf16.mxu0 0
      %488 = vmatpush2.bf16.xpose.msra.mxu0 0
      %489 = vmatprep.subr.bf16.mxu0 0
      %490 = vmatpush2.bf16.xpose.msra.mxu0 0
      %491 = vmatprep.subr.bf16.mxu0 0
      %492 = vmatpush2.bf16.xpose.msra.mxu0 0
      %493 = vmatprep.subr.bf16.mxu0 0
      %494 = vmatpush2.bf16.xpose.msra.mxu0 0
      %495 = vmatprep.subr.bf16.mxu0 0
      %496 = vmatpush2.bf16.xpose.msra.mxu0 0
      %497 = vmatprep.mubr.bf16.mxu0 0
      %498 = vmatmul.mubr.bf16.gmra.mxu0 %v460
      %v499 = vpop.f32.mrf.mxu0
      %v500 = vadd.f32 0.0, %v499
      %v501 = vpop.f32.mrf.mxu0
      %v502 = vpop.f32.mrf.mxu0
      %v503 = vpop.f32.mrf.mxu0
      %504 = vdwg.mxu0
      %v506 = vsel %vm412, %v410, 0
      %v509 = vsel %vm412, %v338, 0
      %511 = vmatprep.subr.bf16.mxu0 0
      %512 = vmatpush1.bf16.xpose.msra.mxu0 0
      %513 = vmatprep.subr.bf16.mxu0 0
      %514 = vmatpush1.bf16.xpose.msra.mxu0 0
      %515 = vmatprep.subr.bf16.mxu0 0
      %516 = vmatpush1.bf16.xpose.msra.mxu0 0
      %517 = vmatprep.subr.bf16.mxu0 0
      %518 = vmatpush1.bf16.xpose.msra.mxu0 0
      %519 = vmatprep.subr.bf16.mxu0 0
      %520 = vmatpush1.bf16.xpose.msra.mxu0 0
      %521 = vmatprep.subr.bf16.mxu0 0
      %522 = vmatpush1.bf16.xpose.msra.mxu0 0
      %523 = vmatprep.subr.bf16.mxu0 0
      %524 = vmatpush1.bf16.xpose.msra.mxu0 0
      %525 = vmatprep.subr.bf16.mxu0 0
      %526 = vmatpush1.bf16.xpose.msra.mxu0 %v509
      %527 = vmatprep.subr.bf16.mxu0 0
      %528 = vmatpush2.bf16.xpose.msra.mxu0 0
      %529 = vmatprep.subr.bf16.mxu0 0
      %530 = vmatpush2.bf16.xpose.msra.mxu0 0
      %531 = vmatprep.subr.bf16.mxu0 0
      %532 = vmatpush2.bf16.xpose.msra.mxu0 0
      %533 = vmatprep.subr.bf16.mxu0 0
      %534 = vmatpush2.bf16.xpose.msra.mxu0 0
      %535 = vmatprep.subr.bf16.mxu0 0
      %536 = vmatpush2.bf16.xpose.msra.mxu0 0
      %537 = vmatprep.subr.bf16.mxu0 0
      %538 = vmatpush2.bf16.xpose.msra.mxu0 0
      %539 = vmatprep.subr.bf16.mxu0 0
      %540 = vmatpush2.bf16.xpose.msra.mxu0 0
      %541 = vmatprep.subr.bf16.mxu0 0
      %542 = vmatpush2.bf16.xpose.msra.mxu0 0
      %543 = vmatprep.mubr.bf16.mxu0 0
      %544 = vmatmul.mubr.bf16.gmra.mxu0 %v506
      %v545 = vpop.f32.mrf.mxu0
      %v546 = vadd.f32 0.0, %v545
      %v547 = vpop.f32.mrf.mxu0
      %v548 = vpop.f32.mrf.mxu0
      %v549 = vpop.f32.mrf.mxu0
      %550 = vdwg.mxu0
      %v552 = vsel %vm412, %v411, 0
      %v555 = vsel %vm412, %v339, 0
      %557 = vmatprep.subr.bf16.mxu0 0
      %558 = vmatpush1.bf16.xpose.msra.mxu0 0
      %559 = vmatprep.subr.bf16.mxu0 0
      %560 = vmatpush1.bf16.xpose.msra.mxu0 0
      %561 = vmatprep.subr.bf16.mxu0 0
      %562 = vmatpush1.bf16.xpose.msra.mxu0 0
      %563 = vmatprep.subr.bf16.mxu0 0
      %564 = vmatpush1.bf16.xpose.msra.mxu0 0
      %565 = vmatprep.subr.bf16.mxu0 0
      %566 = vmatpush1.bf16.xpose.msra.mxu0 0
      %567 = vmatprep.subr.bf16.mxu0 0
      %568 = vmatpush1.bf16.xpose.msra.mxu0 0
      %569 = vmatprep.subr.bf16.mxu0 0
      %570 = vmatpush1.bf16.xpose.msra.mxu0 0
      %571 = vmatprep.subr.bf16.mxu0 0
      %572 = vmatpush1.bf16.xpose.msra.mxu0 %v555
      %573 = vmatprep.subr.bf16.mxu0 0
      %574 = vmatpush2.bf16.xpose.msra.mxu0 0
      %575 = vmatprep.subr.bf16.mxu0 0
      %576 = vmatpush2.bf16.xpose.msra.mxu0 0
      %577 = vmatprep.subr.bf16.mxu0 0
      %578 = vmatpush2.bf16.xpose.msra.mxu0 0
      %579 = vmatprep.subr.bf16.mxu0 0
      %580 = vmatpush2.bf16.xpose.msra.mxu0 0
      %581 = vmatprep.subr.bf16.mxu0 0
      %582 = vmatpush2.bf16.xpose.msra.mxu0 0
      %583 = vmatprep.subr.bf16.mxu0 0
      %584 = vmatpush2.bf16.xpose.msra.mxu0 0
      %585 = vmatprep.subr.bf16.mxu0 0
      %586 = vmatpush2.bf16.xpose.msra.mxu0 0
      %587 = vmatprep.subr.bf16.mxu0 0
      %588 = vmatpush2.bf16.xpose.msra.mxu0 0
      %589 = vmatprep.mubr.bf16.mxu0 0
      %590 = vmatmul.mubr.bf16.gmra.mxu0 %v552
      %v591 = vpop.f32.mrf.mxu0
      %v592 = vadd.f32 0.0, %v591
      %v593 = vpop.f32.mrf.mxu0
      %v594 = vpop.f32.mrf.mxu0
      %v595 = vpop.f32.mrf.mxu0
      %596 = vdwg.mxu0
      %v597 = vlaneseq
      %v598 = vshrl.u32 %v597, 7
      %s599 = smul.u32 %s22, 8
      %v600 = vstv %s599
      %v601 = vadd.s32 %v598, %v600
      %v602 = vadd.s32 %v601, 1
      %vm603 = vcmp.lt.s32.totalorder %v602, 0
      %v604 = vsub.s32 0, %v602
      %v605 = vsel %vm603, %v604, %v602
      %v606 = vshrl.u32 %v605, 3
      %v607 = vand.u32 %v605, 7
      %v608 = vsub.s32 0, %v607
      %v609 = vsel %vm603, %v608, %v607
      %vm610 = vcmp.ne.s32.totalorder %v609, 0
      %vm611 = vcmp.lt.s32.totalorder %v609, 0
      %vm612 = vmand %vm611, %vm610
      %v613 = vadd.s32 %v609, 8
      %v614 = vsel %vm612, %v613, %v609
      %v615 = vand.u32 %v614, 1
      %vm616 = vcmp.ne.s32.totalorder %v615, 0
      %621 = vrot.lane.b32.xlu0 %v454, 121
      %v622 = vpop.permute.xlu0 %621
      %623 = vrot.lane.b32.xlu0 %v500, 121
      %v624 = vpop.permute.xlu0 %623
      %625 = vrot.lane.b32.xlu0 %v546, 121
      %v626 = vpop.permute.xlu0 %625
      %627 = vrot.lane.b32.xlu0 %v592, 121
      %v628 = vpop.permute.xlu0 %627
      %633 = vrot.lane.b32.xlu0 %v454, 1
      %v634 = vpop.permute.xlu0 %633
      %635 = vrot.lane.b32.xlu0 %v500, 1
      %v636 = vpop.permute.xlu0 %635
      %637 = vrot.lane.b32.xlu0 %v546, 1
      %v638 = vpop.permute.xlu0 %637
      %639 = vrot.lane.b32.xlu0 %v592, 1
      %v640 = vpop.permute.xlu0 %639
      %vm645 = vcmask 7168
      %v646 = vsel %vm645, %v622, %v634
      %v647 = vsel %vm645, %v624, %v636
      %v648 = vsel %vm645, %v626, %v638
      %v649 = vsel %vm645, %v628, %v640
      %v650 = vsel %vm616, 1, 0
      %vm651 = vcmp.eq.s32.totalorder %v650, 1
      %v652 = vsel %vm651, %v646, %v454
      %v653 = vsel %vm651, %v647, %v500
      %v654 = vsel %vm651, %v648, %v546
      %v655 = vsel %vm651, %v649, %v592
      %v656 = vand.u32 %v614, 2
      %vm657 = vcmp.ne.s32.totalorder %v656, 0
      %662 = vrot.lane.b32.xlu0 %v652, 122
      %v663 = vpop.permute.xlu0 %662
      %664 = vrot.lane.b32.xlu0 %v653, 122
      %v665 = vpop.permute.xlu0 %664
      %666 = vrot.lane.b32.xlu0 %v654, 122
      %v667 = vpop.permute.xlu0 %666
      %668 = vrot.lane.b32.xlu0 %v655, 122
      %v669 = vpop.permute.xlu0 %668
      %674 = vrot.lane.b32.xlu0 %v652, 2
      %v675 = vpop.permute.xlu0 %674
      %676 = vrot.lane.b32.xlu0 %v653, 2
      %v677 = vpop.permute.xlu0 %676
      %678 = vrot.lane.b32.xlu0 %v654, 2
      %v679 = vpop.permute.xlu0 %678
      %680 = vrot.lane.b32.xlu0 %v655, 2
      %v681 = vpop.permute.xlu0 %680
      %vm686 = vcmask 15360
      %v687 = vsel %vm686, %v663, %v675
      %v688 = vsel %vm686, %v665, %v677
      %v689 = vsel %vm686, %v667, %v679
      %v690 = vsel %vm686, %v669, %v681
      %v691 = vsel %vm657, 1, 0
      %vm692 = vcmp.eq.s32.totalorder %v691, 1
      %v693 = vsel %vm692, %v687, %v652
      %v694 = vsel %vm692, %v688, %v653
      %v695 = vsel %vm692, %v689, %v654
      %v696 = vsel %vm692, %v690, %v655
      %v697 = vand.u32 %v614, 4
      %vm698 = vcmp.ne.s32.totalorder %v697, 0
      %703 = vrot.lane.b32.xlu0 %v693, 124
      %v704 = vpop.permute.xlu0 %703
      %705 = vrot.lane.b32.xlu0 %v694, 124
      %v706 = vpop.permute.xlu0 %705
      %707 = vrot.lane.b32.xlu0 %v695, 124
      %v708 = vpop.permute.xlu0 %707
      %709 = vrot.lane.b32.xlu0 %v696, 124
      %v710 = vpop.permute.xlu0 %709
      %715 = vrot.lane.b32.xlu0 %v693, 4
      %v716 = vpop.permute.xlu0 %715
      %717 = vrot.lane.b32.xlu0 %v694, 4
      %v718 = vpop.permute.xlu0 %717
      %719 = vrot.lane.b32.xlu0 %v695, 4
      %v720 = vpop.permute.xlu0 %719
      %721 = vrot.lane.b32.xlu0 %v696, 4
      %v722 = vpop.permute.xlu0 %721
      %vm727 = vcmask 31744
      %v728 = vsel %vm727, %v704, %v716
      %v729 = vsel %vm727, %v706, %v718
      %v730 = vsel %vm727, %v708, %v720
      %v731 = vsel %vm727, %v710, %v722
      %v732 = vsel %vm698, 1, 0
      %vm733 = vcmp.eq.s32.totalorder %v732, 1
      %v734 = vsel %vm733, %v728, %v693
      %v735 = vsel %vm733, %v729, %v694
      %v736 = vsel %vm733, %v730, %v695
      %v737 = vsel %vm733, %v731, %v696
      %v739 = vsel %vm412, %v376, 0
      %v742 = vsel %vm412, %v328, 0
      %744 = vmatprep.subr.bf16.mxu0 0
      %745 = vmatpush1.bf16.xpose.msra.mxu0 0
      %746 = vmatprep.subr.bf16.mxu0 0
      %747 = vmatpush1.bf16.xpose.msra.mxu0 0
      %748 = vmatprep.subr.bf16.mxu0 0
      %749 = vmatpush1.bf16.xpose.msra.mxu0 0
      %750 = vmatprep.subr.bf16.mxu0 0
      %751 = vmatpush1.bf16.xpose.msra.mxu0 0
      %752 = vmatprep.subr.bf16.mxu0 0
      %753 = vmatpush1.bf16.xpose.msra.mxu0 0
      %754 = vmatprep.subr.bf16.mxu0 0
      %755 = vmatpush1.bf16.xpose.msra.mxu0 0
      %756 = vmatprep.subr.bf16.mxu0 0
      %757 = vmatpush1.bf16.xpose.msra.mxu0 0
      %758 = vmatprep.subr.bf16.mxu0 0
      %759 = vmatpush1.bf16.xpose.msra.mxu0 %v742
      %760 = vmatprep.subr.bf16.mxu0 0
      %761 = vmatpush2.bf16.xpose.msra.mxu0 0
      %762 = vmatprep.subr.bf16.mxu0 0
      %763 = vmatpush2.bf16.xpose.msra.mxu0 0
      %764 = vmatprep.subr.bf16.mxu0 0
      %765 = vmatpush2.bf16.xpose.msra.mxu0 0
      %766 = vmatprep.subr.bf16.mxu0 0
      %767 = vmatpush2.bf16.xpose.msra.mxu0 0
      %768 = vmatprep.subr.bf16.mxu0 0
      %769 = vmatpush2.bf16.xpose.msra.mxu0 0
      %770 = vmatprep.subr.bf16.mxu0 0
      %771 = vmatpush2.bf16.xpose.msra.mxu0 0
      %772 = vmatprep.subr.bf16.mxu0 0
      %773 = vmatpush2.bf16.xpose.msra.mxu0 0
      %774 = vmatprep.subr.bf16.mxu0 0
      %775 = vmatpush2.bf16.xpose.msra.mxu0 0
      %776 = vmatprep.mubr.bf16.mxu0 0
      %777 = vmatmul.mubr.bf16.gmra.mxu0 %v739
      %v778 = vpop.f32.mrf.mxu0
      %v779 = vadd.f32 %v734, %v778
      %v780 = vpop.f32.mrf.mxu0
      %v781 = vpop.f32.mrf.mxu0
      %v782 = vpop.f32.mrf.mxu0
      %783 = vdwg.mxu0
      %v785 = vsel %vm412, %v377, 0
      %v788 = vsel %vm412, %v329, 0
      %790 = vmatprep.subr.bf16.mxu0 0
      %791 = vmatpush1.bf16.xpose.msra.mxu0 0
      %792 = vmatprep.subr.bf16.mxu0 0
      %793 = vmatpush1.bf16.xpose.msra.mxu0 0
      %794 = vmatprep.subr.bf16.mxu0 0
      %795 = vmatpush1.bf16.xpose.msra.mxu0 0
      %796 = vmatprep.subr.bf16.mxu0 0
      %797 = vmatpush1.bf16.xpose.msra.mxu0 0
      %798 = vmatprep.subr.bf16.mxu0 0
      %799 = vmatpush1.bf16.xpose.msra.mxu0 0
      %800 = vmatprep.subr.bf16.mxu0 0
      %801 = vmatpush1.bf16.xpose.msra.mxu0 0
      %802 = vmatprep.subr.bf16.mxu0 0
      %803 = vmatpush1.bf16.xpose.msra.mxu0 0
      %804 = vmatprep.subr.bf16.mxu0 0
      %805 = vmatpush1.bf16.xpose.msra.mxu0 %v788
      %806 = vmatprep.subr.bf16.mxu0 0
      %807 = vmatpush2.bf16.xpose.msra.mxu0 0
      %808 = vmatprep.subr.bf16.mxu0 0
      %809 = vmatpush2.bf16.xpose.msra.mxu0 0
      %810 = vmatprep.subr.bf16.mxu0 0
      %811 = vmatpush2.bf16.xpose.msra.mxu0 0
      %812 = vmatprep.subr.bf16.mxu0 0
      %813 = vmatpush2.bf16.xpose.msra.mxu0 0
      %814 = vmatprep.subr.bf16.mxu0 0
      %815 = vmatpush2.bf16.xpose.msra.mxu0 0
      %816 = vmatprep.subr.bf16.mxu0 0
      %817 = vmatpush2.bf16.xpose.msra.mxu0 0
      %818 = vmatprep.subr.bf16.mxu0 0
      %819 = vmatpush2.bf16.xpose.msra.mxu0 0
      %820 = vmatprep.subr.bf16.mxu0 0
      %821 = vmatpush2.bf16.xpose.msra.mxu0 0
      %822 = vmatprep.mubr.bf16.mxu0 0
      %823 = vmatmul.mubr.bf16.gmra.mxu0 %v785
      %v824 = vpop.f32.mrf.mxu0
      %v825 = vadd.f32 %v735, %v824
      %v826 = vpop.f32.mrf.mxu0
      %v827 = vpop.f32.mrf.mxu0
      %v828 = vpop.f32.mrf.mxu0
      %829 = vdwg.mxu0
      %v831 = vsel %vm412, %v378, 0
      %v834 = vsel %vm412, %v330, 0
      %836 = vmatprep.subr.bf16.mxu0 0
      %837 = vmatpush1.bf16.xpose.msra.mxu0 0
      %838 = vmatprep.subr.bf16.mxu0 0
      %839 = vmatpush1.bf16.xpose.msra.mxu0 0
      %840 = vmatprep.subr.bf16.mxu0 0
      %841 = vmatpush1.bf16.xpose.msra.mxu0 0
      %842 = vmatprep.subr.bf16.mxu0 0
      %843 = vmatpush1.bf16.xpose.msra.mxu0 0
      %844 = vmatprep.subr.bf16.mxu0 0
      %845 = vmatpush1.bf16.xpose.msra.mxu0 0
      %846 = vmatprep.subr.bf16.mxu0 0
      %847 = vmatpush1.bf16.xpose.msra.mxu0 0
      %848 = vmatprep.subr.bf16.mxu0 0
      %849 = vmatpush1.bf16.xpose.msra.mxu0 0
      %850 = vmatprep.subr.bf16.mxu0 0
      %851 = vmatpush1.bf16.xpose.msra.mxu0 %v834
      %852 = vmatprep.subr.bf16.mxu0 0
      %853 = vmatpush2.bf16.xpose.msra.mxu0 0
      %854 = vmatprep.subr.bf16.mxu0 0
      %855 = vmatpush2.bf16.xpose.msra.mxu0 0
      %856 = vmatprep.subr.bf16.mxu0 0
      %857 = vmatpush2.bf16.xpose.msra.mxu0 0
      %858 = vmatprep.subr.bf16.mxu0 0
      %859 = vmatpush2.bf16.xpose.msra.mxu0 0
      %860 = vmatprep.subr.bf16.mxu0 0
      %861 = vmatpush2.bf16.xpose.msra.mxu0 0
      %862 = vmatprep.subr.bf16.mxu0 0
      %863 = vmatpush2.bf16.xpose.msra.mxu0 0
      %864 = vmatprep.subr.bf16.mxu0 0
      %865 = vmatpush2.bf16.xpose.msra.mxu0 0
      %866 = vmatprep.subr.bf16.mxu0 0
      %867 = vmatpush2.bf16.xpose.msra.mxu0 0
      %868 = vmatprep.mubr.bf16.mxu0 0
      %869 = vmatmul.mubr.bf16.gmra.mxu0 %v831
      %v870 = vpop.f32.mrf.mxu0
      %v871 = vadd.f32 %v736, %v870
      %v872 = vpop.f32.mrf.mxu0
      %v873 = vpop.f32.mrf.mxu0
      %v874 = vpop.f32.mrf.mxu0
      %875 = vdwg.mxu0
      %v877 = vsel %vm412, %v379, 0
      %v880 = vsel %vm412, %v331, 0
      %882 = vmatprep.subr.bf16.mxu0 0
      %883 = vmatpush1.bf16.xpose.msra.mxu0 0
      %884 = vmatprep.subr.bf16.mxu0 0
      %885 = vmatpush1.bf16.xpose.msra.mxu0 0
      %886 = vmatprep.subr.bf16.mxu0 0
      %887 = vmatpush1.bf16.xpose.msra.mxu0 0
      %888 = vmatprep.subr.bf16.mxu0 0
      %889 = vmatpush1.bf16.xpose.msra.mxu0 0
      %890 = vmatprep.subr.bf16.mxu0 0
      %891 = vmatpush1.bf16.xpose.msra.mxu0 0
      %892 = vmatprep.subr.bf16.mxu0 0
      %893 = vmatpush1.bf16.xpose.msra.mxu0 0
      %894 = vmatprep.subr.bf16.mxu0 0
      %895 = vmatpush1.bf16.xpose.msra.mxu0 0
      %896 = vmatprep.subr.bf16.mxu0 0
      %897 = vmatpush1.bf16.xpose.msra.mxu0 %v880
      %898 = vmatprep.subr.bf16.mxu0 0
      %899 = vmatpush2.bf16.xpose.msra.mxu0 0
      %900 = vmatprep.subr.bf16.mxu0 0
      %901 = vmatpush2.bf16.xpose.msra.mxu0 0
      %902 = vmatprep.subr.bf16.mxu0 0
      %903 = vmatpush2.bf16.xpose.msra.mxu0 0
      %904 = vmatprep.subr.bf16.mxu0 0
      %905 = vmatpush2.bf16.xpose.msra.mxu0 0
      %906 = vmatprep.subr.bf16.mxu0 0
      %907 = vmatpush2.bf16.xpose.msra.mxu0 0
      %908 = vmatprep.subr.bf16.mxu0 0
      %909 = vmatpush2.bf16.xpose.msra.mxu0 0
      %910 = vmatprep.subr.bf16.mxu0 0
      %911 = vmatpush2.bf16.xpose.msra.mxu0 0
      %912 = vmatprep.subr.bf16.mxu0 0
      %913 = vmatpush2.bf16.xpose.msra.mxu0 0
      %914 = vmatprep.mubr.bf16.mxu0 0
      %915 = vmatmul.mubr.bf16.gmra.mxu0 %v877
      %v916 = vpop.f32.mrf.mxu0
      %v917 = vadd.f32 %v737, %v916
      %v918 = vpop.f32.mrf.mxu0
      %v919 = vpop.f32.mrf.mxu0
      %v920 = vpop.f32.mrf.mxu0
      %921 = vdwg.mxu0
      %v922 = vlaneseq
      %v923 = vand.u32 %v922, 127
      %vm924 = vcmp.gt.s32.totalorder %v923, %v601
      %v925 = vsel %vm924, 1, 0
      %vm926 = vcmp.eq.s32.totalorder %v925, 1
      %v927 = vsel %vm926, -1e+30, %v779
      %v928 = vsel %vm926, -1e+30, %v825
      %v929 = vsel %vm926, -1e+30, %v871
      %v930 = vsel %vm926, -1e+30, %v917
      %v931 = vsel %vm412, %v927, -inf
      %932 = vmax.xlane.f32.xlu0 %v931
      %v933 = vpop.xlane.xlu0 %932
      %v934 = vsel %vm412, %v928, -inf
      %935 = vmax.xlane.f32.xlu0 %v934
      %v936 = vpop.xlane.xlu0 %935
      %v937 = vsel %vm412, %v929, -inf
      %938 = vmax.xlane.f32.xlu0 %v937
      %v939 = vpop.xlane.xlu0 %938
      %v940 = vsel %vm412, %v930, -inf
      %941 = vmax.xlane.f32.xlu0 %v940
      %v942 = vpop.xlane.xlu0 %941
      %v943 = vsub.f32 %v927, %v933
      %v944 = vsub.f32 %v928, %v936
      %v945 = vsub.f32 %v929, %v939
      %v946 = vsub.f32 %v930, %v942
      %v947 = vmul.f32 %v943, 1.442695
      %v948 = vpow.pop %v947
      %v949 = vmul.f32 %v944, 1.442695
      %v950 = vpow.pop %v949
      %v951 = vmul.f32 %v945, 1.442695
      %v952 = vpow.pop %v951
      %v953 = vmul.f32 %v946, 1.442695
      %v954 = vpow.pop %v953
      %v955 = vsel %vm412, %v948, 0.0
      %956 = vadd.xlane.f32.xlu0 %v955
      %v957 = vpop.xlane.xlu0 %956
      %v958 = vsel %vm412, %v950, 0.0
      %959 = vadd.xlane.f32.xlu0 %v958
      %v960 = vpop.xlane.xlu0 %959
      %v961 = vsel %vm412, %v952, 0.0
      %962 = vadd.xlane.f32.xlu0 %v961
      %v963 = vpop.xlane.xlu0 %962
      %v964 = vsel %vm412, %v954, 0.0
      %965 = vadd.xlane.f32.xlu0 %v964
      %v966 = vpop.xlane.xlu0 %965
      %v967 = vpack.c.bf16 %v948, %v948
      %v968 = vpack.c.bf16 %v950, %v950
      %v969 = vpack.c.bf16 %v952, %v952
      %v970 = vpack.c.bf16 %v954, %v954
      %v972 = vsel %vm412, %v967, 0
      %vm974 = vcmask 1043456
      %v976 = vsel %vm974, %v332, 0
      %978 = vmatprep.subr.bf16.mxu0 0
      %979 = vmatpush1.bf16.msra.mxu0 0
      %980 = vmatprep.subr.bf16.mxu0 0
      %981 = vmatpush1.bf16.msra.mxu0 0
      %982 = vmatprep.subr.bf16.mxu0 0
      %983 = vmatpush1.bf16.msra.mxu0 0
      %984 = vmatprep.subr.bf16.mxu0 0
      %985 = vmatpush1.bf16.msra.mxu0 0
      %986 = vmatprep.subr.bf16.mxu0 0
      %987 = vmatpush1.bf16.msra.mxu0 0
      %988 = vmatprep.subr.bf16.mxu0 0
      %989 = vmatpush1.bf16.msra.mxu0 0
      %990 = vmatprep.subr.bf16.mxu0 0
      %991 = vmatpush1.bf16.msra.mxu0 0
      %992 = vmatprep.subr.bf16.mxu0 0
      %993 = vmatpush1.bf16.msra.mxu0 %v976
      %994 = vmatprep.subr.bf16.mxu0 0
      %995 = vmatpush2.bf16.msra.mxu0 0
      %996 = vmatprep.subr.bf16.mxu0 0
      %997 = vmatpush2.bf16.msra.mxu0 0
      %998 = vmatprep.subr.bf16.mxu0 0
      %999 = vmatpush2.bf16.msra.mxu0 0
      %1000 = vmatprep.subr.bf16.mxu0 0
      %1001 = vmatpush2.bf16.msra.mxu0 0
      %1002 = vmatprep.subr.bf16.mxu0 0
      %1003 = vmatpush2.bf16.msra.mxu0 0
      %1004 = vmatprep.subr.bf16.mxu0 0
      %1005 = vmatpush2.bf16.msra.mxu0 0
      %1006 = vmatprep.subr.bf16.mxu0 0
      %1007 = vmatpush2.bf16.msra.mxu0 0
      %1008 = vmatprep.subr.bf16.mxu0 0
      %1009 = vmatpush2.bf16.msra.mxu0 0
      %1010 = vmatprep.mubr.bf16.mxu0 0
      %1011 = vmatmul.mubr.bf16.gmra.mxu0 %v972
      %v1012 = vpop.f32.mrf.mxu0
      %v1013 = vadd.f32 0.0, %v1012
      %v1014 = vpop.f32.mrf.mxu0
      %v1015 = vpop.f32.mrf.mxu0
      %v1016 = vpop.f32.mrf.mxu0
      %1017 = vdwg.mxu0
      %v1019 = vsel %vm412, %v968, 0
      %v1022 = vsel %vm974, %v333, 0
      %1024 = vmatprep.subr.bf16.mxu0 0
      %1025 = vmatpush1.bf16.msra.mxu0 0
      %1026 = vmatprep.subr.bf16.mxu0 0
      %1027 = vmatpush1.bf16.msra.mxu0 0
      %1028 = vmatprep.subr.bf16.mxu0 0
      %1029 = vmatpush1.bf16.msra.mxu0 0
      %1030 = vmatprep.subr.bf16.mxu0 0
      %1031 = vmatpush1.bf16.msra.mxu0 0
      %1032 = vmatprep.subr.bf16.mxu0 0
      %1033 = vmatpush1.bf16.msra.mxu0 0
      %1034 = vmatprep.subr.bf16.mxu0 0
      %1035 = vmatpush1.bf16.msra.mxu0 0
      %1036 = vmatprep.subr.bf16.mxu0 0
      %1037 = vmatpush1.bf16.msra.mxu0 0
      %1038 = vmatprep.subr.bf16.mxu0 0
      %1039 = vmatpush1.bf16.msra.mxu0 %v1022
      %1040 = vmatprep.subr.bf16.mxu0 0
      %1041 = vmatpush2.bf16.msra.mxu0 0
      %1042 = vmatprep.subr.bf16.mxu0 0
      %1043 = vmatpush2.bf16.msra.mxu0 0
      %1044 = vmatprep.subr.bf16.mxu0 0
      %1045 = vmatpush2.bf16.msra.mxu0 0
      %1046 = vmatprep.subr.bf16.mxu0 0
      %1047 = vmatpush2.bf16.msra.mxu0 0
      %1048 = vmatprep.subr.bf16.mxu0 0
      %1049 = vmatpush2.bf16.msra.mxu0 0
      %1050 = vmatprep.subr.bf16.mxu0 0
      %1051 = vmatpush2.bf16.msra.mxu0 0
      %1052 = vmatprep.subr.bf16.mxu0 0
      %1053 = vmatpush2.bf16.msra.mxu0 0
      %1054 = vmatprep.subr.bf16.mxu0 0
      %1055 = vmatpush2.bf16.msra.mxu0 0
      %1056 = vmatprep.mubr.bf16.mxu0 0
      %1057 = vmatmul.mubr.bf16.gmra.mxu0 %v1019
      %v1058 = vpop.f32.mrf.mxu0
      %v1059 = vadd.f32 0.0, %v1058
      %v1060 = vpop.f32.mrf.mxu0
      %v1061 = vpop.f32.mrf.mxu0
      %v1062 = vpop.f32.mrf.mxu0
      %1063 = vdwg.mxu0
      %v1065 = vsel %vm412, %v969, 0
      %v1068 = vsel %vm974, %v334, 0
      %1070 = vmatprep.subr.bf16.mxu0 0
      %1071 = vmatpush1.bf16.msra.mxu0 0
      %1072 = vmatprep.subr.bf16.mxu0 0
      %1073 = vmatpush1.bf16.msra.mxu0 0
      %1074 = vmatprep.subr.bf16.mxu0 0
      %1075 = vmatpush1.bf16.msra.mxu0 0
      %1076 = vmatprep.subr.bf16.mxu0 0
      %1077 = vmatpush1.bf16.msra.mxu0 0
      %1078 = vmatprep.subr.bf16.mxu0 0
      %1079 = vmatpush1.bf16.msra.mxu0 0
      %1080 = vmatprep.subr.bf16.mxu0 0
      %1081 = vmatpush1.bf16.msra.mxu0 0
      %1082 = vmatprep.subr.bf16.mxu0 0
      %1083 = vmatpush1.bf16.msra.mxu0 0
      %1084 = vmatprep.subr.bf16.mxu0 0
      %1085 = vmatpush1.bf16.msra.mxu0 %v1068
      %1086 = vmatprep.subr.bf16.mxu0 0
      %1087 = vmatpush2.bf16.msra.mxu0 0
      %1088 = vmatprep.subr.bf16.mxu0 0
      %1089 = vmatpush2.bf16.msra.mxu0 0
      %1090 = vmatprep.subr.bf16.mxu0 0
      %1091 = vmatpush2.bf16.msra.mxu0 0
      %1092 = vmatprep.subr.bf16.mxu0 0
      %1093 = vmatpush2.bf16.msra.mxu0 0
      %1094 = vmatprep.subr.bf16.mxu0 0
      %1095 = vmatpush2.bf16.msra.mxu0 0
      %1096 = vmatprep.subr.bf16.mxu0 0
      %1097 = vmatpush2.bf16.msra.mxu0 0
      %1098 = vmatprep.subr.bf16.mxu0 0
      %1099 = vmatpush2.bf16.msra.mxu0 0
      %1100 = vmatprep.subr.bf16.mxu0 0
      %1101 = vmatpush2.bf16.msra.mxu0 0
      %1102 = vmatprep.mubr.bf16.mxu0 0
      %1103 = vmatmul.mubr.bf16.gmra.mxu0 %v1065
      %v1104 = vpop.f32.mrf.mxu0
      %v1105 = vadd.f32 0.0, %v1104
      %v1106 = vpop.f32.mrf.mxu0
      %v1107 = vpop.f32.mrf.mxu0
      %v1108 = vpop.f32.mrf.mxu0
      %1109 = vdwg.mxu0
      %v1111 = vsel %vm412, %v970, 0
      %v1114 = vsel %vm974, %v335, 0
      %1116 = vmatprep.subr.bf16.mxu0 0
      %1117 = vmatpush1.bf16.msra.mxu0 0
      %1118 = vmatprep.subr.bf16.mxu0 0
      %1119 = vmatpush1.bf16.msra.mxu0 0
      %1120 = vmatprep.subr.bf16.mxu0 0
      %1121 = vmatpush1.bf16.msra.mxu0 0
      %1122 = vmatprep.subr.bf16.mxu0 0
      %1123 = vmatpush1.bf16.msra.mxu0 0
      %1124 = vmatprep.subr.bf16.mxu0 0
      %1125 = vmatpush1.bf16.msra.mxu0 0
      %1126 = vmatprep.subr.bf16.mxu0 0
      %1127 = vmatpush1.bf16.msra.mxu0 0
      %1128 = vmatprep.subr.bf16.mxu0 0
      %1129 = vmatpush1.bf16.msra.mxu0 0
      %1130 = vmatprep.subr.bf16.mxu0 0
      %1131 = vmatpush1.bf16.msra.mxu0 %v1114
      %1132 = vmatprep.subr.bf16.mxu0 0
      %1133 = vmatpush2.bf16.msra.mxu0 0
      %1134 = vmatprep.subr.bf16.mxu0 0
      %1135 = vmatpush2.bf16.msra.mxu0 0
      %1136 = vmatprep.subr.bf16.mxu0 0
      %1137 = vmatpush2.bf16.msra.mxu0 0
      %1138 = vmatprep.subr.bf16.mxu0 0
      %1139 = vmatpush2.bf16.msra.mxu0 0
      %1140 = vmatprep.subr.bf16.mxu0 0
      %1141 = vmatpush2.bf16.msra.mxu0 0
      %1142 = vmatprep.subr.bf16.mxu0 0
      %1143 = vmatpush2.bf16.msra.mxu0 0
      %1144 = vmatprep.subr.bf16.mxu0 0
      %1145 = vmatpush2.bf16.msra.mxu0 0
      %1146 = vmatprep.subr.bf16.mxu0 0
      %1147 = vmatpush2.bf16.msra.mxu0 0
      %1148 = vmatprep.mubr.bf16.mxu0 0
      %1149 = vmatmul.mubr.bf16.gmra.mxu0 %v1111
      %v1150 = vpop.f32.mrf.mxu0
      %v1151 = vadd.f32 0.0, %v1150
      %v1152 = vpop.f32.mrf.mxu0
      %v1153 = vpop.f32.mrf.mxu0
      %v1154 = vpop.f32.mrf.mxu0
      %1155 = vdwg.mxu0
      %v1156 = vrcp.pop %v957
      %v1157 = vrcp.pop %v960
      %v1158 = vrcp.pop %v963
      %v1159 = vrcp.pop %v966
      %v1160 = vmul.f32 %v1013, %v1156
      %v1161 = vmul.f32 %v1059, %v1157
      %v1162 = vmul.f32 %v1105, %v1158
      %v1163 = vmul.f32 %v1151, %v1159
      %v1164 = vpack.c.bf16 %v1160, %v1160
      %v1165 = vpack.c.bf16 %v1161, %v1161
      %v1166 = vpack.c.bf16 %v1162, %v1162
      %v1167 = vpack.c.bf16 %v1163, %v1163
      %vm1168 = vcmask 60416
      %1169 = vst.msk [vmem:[%s322] sm:$0xf] %vm1168, %v1164
      %1170 = vst.msk [vmem:[%s322 + $0x4] sm:$0xf] %vm1168, %v1165
      %1171 = vst.msk [vmem:[%s322 + $0x8] sm:$0xf] %vm1168, %v1166
      %1172 = vst.msk [vmem:[%s322 + $0xc] sm:$0xf] %vm1168, %v1167
      %p1173 = scmp.lt.s32.totalorder %s21, 1
      %s1174 = scalar_select %p1173, %s21, 1
      %p1175 = scmp.lt.s32.totalorder %s22, 0
      %s1176 = scalar_select %p1175, %s22, 0
      %s1177 = smul.addr %s1174, 4
      %s1178 = sadd.s32 %s1176, %s1177
      %s1179 = smul.addr %s1178, 4
      %s1180 = scalar_lea.vmem %s6, %s1179
      // Predicated region
      $region45: #{rel_partial_mha_forward.10} parent=43 // pred_check
        %p1181 = pneg %p192
      $region46: #{rel_partial_mha_forward.10} parent=43 // pred_check_branch
        %1183 = sbr.rel (%p1181) target = $region48
      $region47: #{rel_partial_mha_forward.10} parent=43 // pred_region
        _
      $region48: #{rel_partial_mha_forward.10} parent=43 // pred_fallthru
        _
    $region44: #{rel_partial_mha_forward.10} parent=5 // pred_fallthru
      _
    %p1184 = scmp.le.s32.totalorder 2, %s12
    // Predicated region
    $region49: #{rel_partial_mha_forward.10} parent=5 // pred_check
      %p1185 = pneg %p1184
    $region50: #{rel_partial_mha_forward.10} parent=5 // pred_check_branch
      %1187 = sbr.rel (%p1185) target = $region52
    $region51: #{rel_partial_mha_forward.10} parent=5 // pred_region
      %s1188 = ssub.s32 %s12, 2
      // Predicated region
      $region53: #{rel_partial_mha_forward.10} parent=51 // pred_check
        %p1189 = pneg %p198
      $region54: #{rel_partial_mha_forward.10} parent=51 // pred_check_branch
        %1191 = sbr.rel (%p1189) target = $region56
      $region55: #{rel_partial_mha_forward.10} parent=51 // pred_region
        %p1192 = scmp.lt.s32.totalorder %s23, 1
        %s1193 = scalar_select %p1192, %s23, 1
        %p1194 = scmp.lt.s32.totalorder %s24, 0
        %s1195 = scalar_select %p1194, %s24, 0
        %s1196 = smul.addr %s1193, 4
        %s1197 = sadd.s32 %s1195, %s1196
        %s1198 = smul.addr %s1197, 4
        %s1199 = scalar_lea.vmem %s6, %s1198
      $region56: #{rel_partial_mha_forward.10} parent=51 // pred_fallthru
        _
    $region52: #{rel_partial_mha_forward.10} parent=5 // pred_fallthru
      _
  $region6: #{rel_partial_mha_forward.10} parent=0 // loop_footer
    %s16 = sadd.s32 1, %s12
  $region7: #{rel_partial_mha_forward.10} parent=0 // loop_footer_branch
    %11 = sbr.rel target = $region3
  $region8: #{rel_partial_mha_forward.10} parent=0 // loop_exit
    _

</llo_original>
